<compile_context>
chip_gen: v7x
topology: tpu7x:2x2x1
jax: 0.10.0
libtpu: 0.0.40
codegen_flags: <defaults>
</compile_context>

<pallas_src>
import math
from functools import partial

import jax
import jax.numpy as jnp
from jax.experimental import pallas as pl
from jax.experimental.pallas import tpu as pltpu


# --------------------------------------------------------------------------
# Helpers
# --------------------------------------------------------------------------
def _round_up(n, m):
    return ((n + m - 1) // m) * m


def _pad2d(a, rows, cols):
    r, c = a.shape
    return jnp.pad(a, ((0, rows - r), (0, cols - c)))


def _pick_tiles(n, tm_req=512, tk_req=1024):
    """Pick row / contraction tiles: big (mem-bound), 128-aligned, and with
    at least 2 row tiles so the 'parallel' axis can shard across v7x's TCs."""
    n128 = _round_up(n, 128)
    tm = min(tm_req, n128)
    if n128 >= 256:
        while _round_up(n, tm) // tm < 2 and tm > 128:
            tm = _round_up(tm // 2, 128)
    tk = min(tk_req, n128)
    return tm, tk


# --------------------------------------------------------------------------
# Kernel
# --------------------------------------------------------------------------
def linkx_kernel(a_ref, we_ref, x_ref, wn_ref, bh_ref, wf_ref, bf_ref,
                 o_ref, acc_ref, *, tk, we_resident):
    k = pl.program_id(1)

    # Initialize the accumulator with the node path (moves x@Wn' + b' off the
    # last-k epilogue onto the first iteration).
    @pl.when(k == 0)
    def _():
        acc_ref[...] = (jnp.dot(x_ref[...], wn_ref[...],
                                preferred_element_type=jnp.float32)
                        + bh_ref[...])

    # Streamed contraction over adjacency columns: acc += A[i, k] @ We'[k, :]
    if we_resident:
        start = pl.multiple_of(k * tk, tk)          # We' resident in VMEM
        we_blk = we_ref[pl.ds(start, tk), :]
    else:
        we_blk = we_ref[...]                        # streamed (tk, H) tile
    acc_ref[...] += jnp.dot(a_ref[...], we_blk,
                            preferred_element_type=jnp.float32)

    @pl.when(k == pl.num_programs(1) - 1)
    def _():
        h = jnp.maximum(acc_ref[...], 0.0)          # relu in f32 (v5e-safe)
        o_ref[...] = (jnp.dot(h.astype(jnp.bfloat16), wf_ref[...],
                              preferred_element_type=jnp.float32)
                      + bf_ref[...]).astype(o_ref.dtype)


# --------------------------------------------------------------------------
# One-time input preparation (per graph / per parameter set)
# --------------------------------------------------------------------------
def prepare_linkx_inputs(edge_index, edge_weight, x, params, *,
                         tm_req=512, tk_req=1024,
                         we_resident_limit_bytes=8 << 20):
    """Folds cat_lin weights, builds the tile-aligned bf16 dense adjacency
    (scatter-add in f32, single cast) and pads all operands.  Do this ONCE and
    reuse the result across forward calls — it is deliberately outside the
    jitted forward so the mem-bound kernel is not preceded by an extra N^2
    repack pass through HBM."""
    N = params["w_edge"].shape[0]
    in_channels = x.shape[1]
    H = params["w_edge"].shape[1]
    out_channels = params["w_final"].shape[1]

    tm, tk = _pick_tiles(N, tm_req, tk_req)
    m_pad = _round_up(N, tm)
    k_pad = _round_up(N, tk)
    in_pad = _round_up(in_channels, 128)
    h_pad = _round_up(H, 128)
    c_pad = _round_up(out_channels, 128)

    # Dense adjacency built directly into the tile-aligned buffer.
    src, dst = edge_index[0], edge_index[1]
    w = (jnp.ones(src.shape, jnp.float32) if edge_weight is None
         else edge_weight.astype(jnp.float32))
    adj_f32 = jnp.zeros((m_pad, k_pad), jnp.float32).at[dst, src].add(w)
    a_p = adj_f32.astype(jnp.bfloat16)
    # TODO(synk): stream A as int8 (v5e/v6e MXU) / fp8-e4m3 (v7x) with a dequant
    # scale when edge weights are 0/1 or small integer counts; and for E << N^2
    # replace the dense A@We' with a CSR scalar-prefetch gather-accumulate.

    # Fold cat_lin1 / cat_lin2 into the edge / node weights (f32, offline).
    eye = jnp.eye(H, dtype=jnp.float32)
    m1 = eye + params["w_cat1"]
    m2 = eye + params["w_cat2"]
    we = params["w_edge"] @ m1                                   # (N, H)
    wn = params["w_node"] @ m2                                   # (in, H)
    bh = (params["b_edge"] @ m1 + params["b_cat1"]
          + params["b_node"] @ m2 + params["b_cat2"])            # (1, H)

    x_p = _pad2d(x.astype(jnp.float32), m_pad, in_pad).astype(jnp.bfloat16)
    we_p = _pad2d(we, k_pad, h_pad).astype(jnp.bfloat16)
    wn_p = _pad2d(wn, in_pad, h_pad).astype(jnp.bfloat16)
    bh_p = _pad2d(bh, 1, h_pad)                                  # f32
    wf_p = _pad2d(params["w_final"], h_pad, c_pad).astype(jnp.bfloat16)
    bf_p = _pad2d(params["b_final"], 1, c_pad)                   # f32

    we_resident = (k_pad * h_pad * 2) <= we_resident_limit_bytes

    arrays = (a_p, we_p, x_p, wn_p, bh_p, wf_p, bf_p)
    meta = dict(tm=tm, tk=tk, n_valid=N, out_channels=out_channels,
                we_resident=we_resident)
    return arrays, meta


# --------------------------------------------------------------------------
# Jitted forward: pallas_call only (inputs are already padded / cast)
# --------------------------------------------------------------------------
@partial(jax.jit, static_argnames=("tm", "tk", "n_valid", "out_channels",
                                   "we_resident", "out_dtype"))
def linkx_forward_padded(a_p, we_p, x_p, wn_p, bh_p, wf_p, bf_p, *,
                         tm, tk, n_valid, out_channels, we_resident,
                         out_dtype=jnp.float32):
    m_pad, k_pad = a_p.shape
    in_pad = x_p.shape[1]
    h_pad = we_p.shape[1]
    c_pad = wf_p.shape[1]
    grid = (m_pad // tm, k_pad // tk)

    we_spec = (pl.BlockSpec((k_pad, h_pad), lambda i, k: (0, 0)) if we_resident
               else pl.BlockSpec((tk, h_pad), lambda i, k: (k, 0)))

    # Advisory cost estimate (includes We' re-stream when streamed + writeback)
    out_itemsize = jnp.dtype(out_dtype).itemsize
    we_reads = 1 if we_resident else (m_pad // tm)
    flops = (2 * m_pad * k_pad * h_pad
             + 2 * m_pad * in_pad * h_pad
             + 2 * m_pad * h_pad * c_pad)
    bytes_accessed = (m_pad * k_pad * 2
                      + we_reads * k_pad * h_pad * 2
                      + m_pad * in_pad * 2
                      + in_pad * h_pad * 2
                      + h_pad * c_pad * 2
                      + (h_pad + c_pad) * 4
                      + m_pad * c_pad * out_itemsize)

    # VMEM budget derived from the actual (double-buffered) footprint.
    we_rows_vmem = k_pad if we_resident else tk
    vmem_bytes = (2 * tm * tk * 2                    # A tiles (bf16, 2 bufs)
                  + 2 * we_rows_vmem * h_pad * 2     # We'
                  + 2 * tm * in_pad * 2              # x rows
                  + 2 * in_pad * h_pad * 2           # Wn'
                  + 2 * h_pad * c_pad * 2            # W_final
                  + 2 * 8 * (h_pad + c_pad) * 4      # biases (sublane-padded)
                  + 2 * tm * c_pad * out_itemsize    # output tile
                  + tm * h_pad * 4)                  # f32 accumulator scratch
    vmem_limit = int(min(max(2 * vmem_bytes, 16 << 20), 48 << 20))

    out = pl.pallas_call(
        partial(linkx_kernel, tk=tk, we_resident=we_resident),
        out_shape=jax.ShapeDtypeStruct((m_pad, c_pad), out_dtype),
        grid_spec=pltpu.PrefetchScalarGridSpec(
            num_scalar_prefetch=0,
            grid=grid,
            in_specs=[
                pl.BlockSpec((tm, tk), lambda i, k: (i, k)),          # A tile
                we_spec,                                              # We'
                pl.BlockSpec((tm, in_pad), lambda i, k: (i, 0)),      # x rows
                pl.BlockSpec((in_pad, h_pad), lambda i, k: (0, 0)),   # Wn'
                pl.BlockSpec((1, h_pad), lambda i, k: (0, 0)),        # fused bias
                pl.BlockSpec((h_pad, c_pad), lambda i, k: (0, 0)),    # W_final
                pl.BlockSpec((1, c_pad), lambda i, k: (0, 0)),        # b_final
            ],
            out_specs=pl.BlockSpec((tm, c_pad), lambda i, k: (i, 0)),
            scratch_shapes=[pltpu.VMEM((tm, h_pad), jnp.float32)],
        ),
        compiler_params=pltpu.CompilerParams(
            dimension_semantics=("parallel", "arbitrary"),
            vmem_limit_bytes=vmem_limit,
        ),
        cost_estimate=pl.CostEstimate(
            flops=flops, transcendentals=0, bytes_accessed=bytes_accessed),
    )(a_p, we_p, x_p, wn_p, bh_p, wf_p, bf_p)

    return out[:n_valid, :out_channels]


def linkx_forward(prepared_arrays, meta, out_dtype=jnp.float32):
    return linkx_forward_padded(*prepared_arrays, out_dtype=out_dtype, **meta)


# --------------------------------------------------------------------------
# Parameter init (shapes / distributions match the PyTorch module)
# --------------------------------------------------------------------------
def init_linkx_params(key, num_nodes, in_channels, hidden_channels, out_channels):
    ks = jax.random.split(key, 12)

    def kaiming_uniform_t(k, fan_in, fan_out):
        # Returns (fan_in, fan_out) == transposed PyTorch Linear weight.
        bound = math.sqrt(6.0 / fan_in) / math.sqrt(1.0 + 5.0)  # a = sqrt(5)
        return jax.random.uniform(k, (fan_in, fan_out), jnp.float32, -bound, bound)

    def bias_uniform(k, fan_in, fan_out):
        bound = 1.0 / math.sqrt(fan_in)
        return jax.random.uniform(k, (1, fan_out), jnp.float32, -bound, bound)

    return {
        "w_edge": kaiming_uniform_t(ks[0], num_nodes, hidden_channels),
        "b_edge": bias_uniform(ks[1], num_nodes, hidden_channels),
        "w_node": kaiming_uniform_t(ks[2], in_channels, hidden_channels),
        "b_node": bias_uniform(ks[3], in_channels, hidden_channels),
        "w_cat1": kaiming_uniform_t(ks[4], hidden_channels, hidden_channels),
        "b_cat1": bias_uniform(ks[5], hidden_channels, hidden_channels),
        "w_cat2": kaiming_uniform_t(ks[6], hidden_channels, hidden_channels),
        "b_cat2": bias_uniform(ks[7], hidden_channels, hidden_channels),
        "w_final": kaiming_uniform_t(ks[8], hidden_channels, out_channels),
        "b_final": bias_uniform(ks[9], hidden_channels, out_channels),
    }


def build_dense_adj(edge_index, edge_weight, num_nodes):
    """f32 dense adjacency for the pure-JAX reference."""
    src, dst = edge_index[0], edge_index[1]
    w = (jnp.ones(src.shape, jnp.float32)
         if edge_weight is None else edge_weight.astype(jnp.float32))
    adj = jnp.zeros((num_nodes, num_nodes), jnp.float32)
    return adj.at[dst, src].add(w)


# --------------------------------------------------------------------------
# Pure-JAX reference of the original (unfused, f32) forward
# --------------------------------------------------------------------------
def linkx_reference(adj, x, p):
    out = adj @ p["w_edge"] + p["b_edge"]
    out = out + (out @ p["w_cat1"] + p["b_cat1"])
    xh = x @ p["w_node"] + p["b_node"]
    out = out + xh
    out = out + (xh @ p["w_cat2"] + p["b_cat2"])
    out = jnp.maximum(out, 0.0)
    return out @ p["w_final"] + p["b_final"]


if __name__ == "__main__":
    num_nodes = 512
    in_channels = 16
    hidden_channels = 32
    out_channels = 8
    num_edges = 4096

    key = jax.random.PRNGKey(0)
    k_param, k_src, k_dst, k_ew, k_x = jax.random.split(key, 5)

    params = init_linkx_params(k_param, num_nodes, in_channels,
                               hidden_channels, out_channels)

    src = jax.random.randint(k_src, (num_edges,), 0, num_nodes)
    dst = jax.random.randint(k_dst, (num_edges,), 0, num_nodes)
    edge_index = jnp.stack([src, dst], axis=0)                  # (2, E)
    edge_weight = jax.random.uniform(k_ew, (num_edges,), jnp.float32)
    x = jax.random.normal(k_x, (num_nodes, in_channels), jnp.float32)

    # One-time packing (padding, bf16 cast, weight folding) outside the
    # per-call forward path.
    prepared, meta = prepare_linkx_inputs(edge_index, edge_weight, x, params)

    y = linkx_forward(prepared, meta)
    jax.block_until_ready(y)

    # f32 reference of the original (unfolded) module forward.
    adj = build_dense_adj(edge_index, edge_weight, num_nodes)
    y_ref = linkx_reference(adj, x, params)

    assert y.shape == (num_nodes, out_channels)
    assert bool(jnp.all(jnp.isfinite(y)))
    max_err = float(jnp.max(jnp.abs(y - y_ref)))
    assert max_err < 5e-2, f"max abs err vs f32 reference: {max_err}"
    print("KERNEL_OK")
</pallas_src>

<mosaic_0001>
module attributes {stable_mosaic.version = 11 : i64} {
  func.func @linkx_kernel(%arg0: i32, %arg1: i32, %arg2: memref<256x512xbf16, #tpu.memory_space<vmem>>, %arg3: memref<512x128xbf16, #tpu.memory_space<vmem>>, %arg4: memref<256x128xbf16, #tpu.memory_space<vmem>>, %arg5: memref<128x128xbf16, #tpu.memory_space<vmem>>, %arg6: memref<1x128xf32, #tpu.memory_space<vmem>>, %arg7: memref<128x128xbf16, #tpu.memory_space<vmem>>, %arg8: memref<1x128xf32, #tpu.memory_space<vmem>>, %arg9: memref<256x128xf32, #tpu.memory_space<vmem>>, %arg10: memref<256x128xf32, #tpu.memory_space<vmem>>) attributes {dimension_semantics = [#tpu.dimension_semantics<parallel>, #tpu.dimension_semantics<arbitrary>], iteration_bounds = array<i64: 2, 1>, scalar_prefetch = 0 : i64, scratch_operands = 1 : i64, tpu.core_type = #tpu.core_type<tc>, window_params = [{transform_indices = @transform_0, window_bounds = array<i64: 256, 512>}, {pipeline_mode = #tpu.pipeline_mode<synchronous>, transform_indices = @transform_1, window_bounds = array<i64: 512, 128>}, {transform_indices = @transform_2, window_bounds = array<i64: 256, 128>}, {pipeline_mode = #tpu.pipeline_mode<synchronous>, transform_indices = @transform_3, window_bounds = array<i64: 128, 128>}, {pipeline_mode = #tpu.pipeline_mode<synchronous>, transform_indices = @transform_4, window_bounds = array<i64: 1, 128>}, {pipeline_mode = #tpu.pipeline_mode<synchronous>, transform_indices = @transform_5, window_bounds = array<i64: 128, 128>}, {pipeline_mode = #tpu.pipeline_mode<synchronous>, transform_indices = @transform_6, window_bounds = array<i64: 1, 128>}, {transform_indices = @transform_7, window_bounds = array<i64: 256, 128>}]} {
    %c0_i32 = arith.constant 0 : i32
    %0 = arith.cmpi eq, %arg1, %c0_i32 : i32
    %1 = arith.extui %0 : i1 to i32
    %c0_i32_0 = arith.constant 0 : i32
    %2 = arith.cmpi ne, %1, %c0_i32_0 : i32
    scf.if %2 {
      %c0_9 = arith.constant 0 : index
      %c0_10 = arith.constant 0 : index
      %15 = vector.load %arg4[%c0_9, %c0_10] : memref<256x128xbf16, #tpu.memory_space<vmem>>, vector<256x128xbf16>
      %c0_11 = arith.constant 0 : index
      %c0_12 = arith.constant 0 : index
      %16 = vector.load %arg5[%c0_11, %c0_12] : memref<128x128xbf16, #tpu.memory_space<vmem>>, vector<128x128xbf16>
      %cst_13 = arith.constant dense<0.000000e+00> : vector<256x128xf32>
      %17 = tpu.matmul %15, %16, %cst_13 {dimension_numbers = #tpu.dot_dimension_numbers<[1], [0], [0], [1], [0, 0, 1, 1], [], []>} : vector<256x128xbf16>, vector<128x128xbf16>, vector<256x128xf32> -> vector<256x128xf32>
      %c0_14 = arith.constant 0 : index
      %c0_15 = arith.constant 0 : index
      %18 = vector.load %arg6[%c0_14, %c0_15] : memref<1x128xf32, #tpu.memory_space<vmem>>, vector<1x128xf32>
      %19 = vector.broadcast %18 : vector<1x128xf32> to vector<256x128xf32>
      %20 = arith.addf %17, %19 : vector<256x128xf32>
      %c0_16 = arith.constant 0 : index
      %c0_17 = arith.constant 0 : index
      %21 = vector.load %arg10[%c0_16, %c0_17] : memref<256x128xf32, #tpu.memory_space<vmem>>, vector<256x128xf32>
      tpu.vector_store %arg10[%c0_16, %c0_17], %20 {strides = array<i32>} : memref<256x128xf32, #tpu.memory_space<vmem>>, vector<256x128xf32>,
    } else {
    }
    %c512_i32 = arith.constant 512 : i32
    %3 = arith.muli %arg1, %c512_i32 : i32
    %4 = tpu.assume_multiple %3, 512 : i32
    %5 = arith.index_cast %4 : i32 to index
    %c0 = arith.constant 0 : index
    %6 = vector.load %arg3[%5, %c0] : memref<512x128xbf16, #tpu.memory_space<vmem>>, vector<512x128xbf16>
    %c0_1 = arith.constant 0 : index
    %c0_2 = arith.constant 0 : index
    %7 = vector.load %arg10[%c0_1, %c0_2] : memref<256x128xf32, #tpu.memory_space<vmem>>, vector<256x128xf32>
    %c0_3 = arith.constant 0 : index
    %c0_4 = arith.constant 0 : index
    %8 = vector.load %arg2[%c0_3, %c0_4] : memref<256x512xbf16, #tpu.memory_space<vmem>>, vector<256x512xbf16>
    %cst = arith.constant dense<0.000000e+00> : vector<256x128xf32>
    %9 = tpu.matmul %8, %6, %cst {dimension_numbers = #tpu.dot_dimension_numbers<[1], [0], [0], [1], [0, 0, 1, 1], [], []>} : vector<256x512xbf16>, vector<512x128xbf16>, vector<256x128xf32> -> vector<256x128xf32>
    %10 = arith.addf %7, %9 : vector<256x128xf32>
    %c0_5 = arith.constant 0 : index
    %c0_6 = arith.constant 0 : index
    %11 = vector.load %arg10[%c0_5, %c0_6] : memref<256x128xf32, #tpu.memory_space<vmem>>, vector<256x128xf32>
    tpu.vector_store %arg10[%c0_5, %c0_6], %10 {strides = array<i32>} : memref<256x128xf32, #tpu.memory_space<vmem>>, vector<256x128xf32>,
    %c0_i32_7 = arith.constant 0 : i32
    %12 = arith.cmpi eq, %arg1, %c0_i32_7 : i32
    %13 = arith.extui %12 : i1 to i32
    %c0_i32_8 = arith.constant 0 : i32
    %14 = arith.cmpi ne, %13, %c0_i32_8 : i32
    scf.if %14 {
      %c0_9 = arith.constant 0 : index
      %c0_10 = arith.constant 0 : index
      %15 = vector.load %arg10[%c0_9, %c0_10] : memref<256x128xf32, #tpu.memory_space<vmem>>, vector<256x128xf32>
      %cst_11 = arith.constant 0.000000e+00 : f32
      %16 = vector.broadcast %cst_11 : f32 to vector<256x128xf32>
      %17 = arith.maximumf %15, %16 : vector<256x128xf32>
      %18 = arith.truncf %17 : vector<256x128xf32> to vector<256x128xbf16>
      %c0_12 = arith.constant 0 : index
      %c0_13 = arith.constant 0 : index
      %19 = vector.load %arg7[%c0_12, %c0_13] : memref<128x128xbf16, #tpu.memory_space<vmem>>, vector<128x128xbf16>
      %cst_14 = arith.constant dense<0.000000e+00> : vector<256x128xf32>
      %20 = tpu.matmul %18, %19, %cst_14 {dimension_numbers = #tpu.dot_dimension_numbers<[1], [0], [0], [1], [0, 0, 1, 1], [], []>} : vector<256x128xbf16>, vector<128x128xbf16>, vector<256x128xf32> -> vector<256x128xf32>
      %c0_15 = arith.constant 0 : index
      %c0_16 = arith.constant 0 : index
      %21 = vector.load %arg8[%c0_15, %c0_16] : memref<1x128xf32, #tpu.memory_space<vmem>>, vector<1x128xf32>
      %22 = vector.broadcast %21 : vector<1x128xf32> to vector<256x128xf32>
      %23 = arith.addf %20, %22 : vector<256x128xf32>
      %c0_17 = arith.constant 0 : index
      %c0_18 = arith.constant 0 : index
      %24 = vector.load %arg9[%c0_17, %c0_18] : memref<256x128xf32, #tpu.memory_space<vmem>>, vector<256x128xf32>
      tpu.vector_store %arg9[%c0_17, %c0_18], %23 {strides = array<i32>} : memref<256x128xf32, #tpu.memory_space<vmem>>, vector<256x128xf32>,
    } else {
    }
    return
  }
  func.func @transform_0(%arg0: i32, %arg1: i32) -> (i32, i32) {
    %c0_i32 = arith.constant 0 : i32
    return %arg0, %arg1 : i32, i32
  }
  func.func @transform_1(%arg0: i32, %arg1: i32) -> (i32, i32) {
    %c0_i32 = arith.constant 0 : i32
    %c0_i32_0 = arith.constant 0 : i32
    %c0_i32_1 = arith.constant 0 : i32
    return %c0_i32, %c0_i32_0 : i32, i32
  }
  func.func @transform_2(%arg0: i32, %arg1: i32) -> (i32, i32) {
    %c0_i32 = arith.constant 0 : i32
    %c0_i32_0 = arith.constant 0 : i32
    return %arg0, %c0_i32 : i32, i32
  }
  func.func @transform_3(%arg0: i32, %arg1: i32) -> (i32, i32) {
    %c0_i32 = arith.constant 0 : i32
    %c0_i32_0 = arith.constant 0 : i32
    %c0_i32_1 = arith.constant 0 : i32
    return %c0_i32, %c0_i32_0 : i32, i32
  }
  func.func @transform_4(%arg0: i32, %arg1: i32) -> (i32, i32) {
    %c0_i32 = arith.constant 0 : i32
    %c0_i32_0 = arith.constant 0 : i32
    %c0_i32_1 = arith.constant 0 : i32
    return %c0_i32, %c0_i32_0 : i32, i32
  }
  func.func @transform_5(%arg0: i32, %arg1: i32) -> (i32, i32) {
    %c0_i32 = arith.constant 0 : i32
    %c0_i32_0 = arith.constant 0 : i32
    %c0_i32_1 = arith.constant 0 : i32
    return %c0_i32, %c0_i32_0 : i32, i32
  }
  func.func @transform_6(%arg0: i32, %arg1: i32) -> (i32, i32) {
    %c0_i32 = arith.constant 0 : i32
    %c0_i32_0 = arith.constant 0 : i32
    %c0_i32_1 = arith.constant 0 : i32
    return %c0_i32, %c0_i32_0 : i32, i32
  }
  func.func @transform_7(%arg0: i32, %arg1: i32) -> (i32, i32) {
    %c0_i32 = arith.constant 0 : i32
    %c0_i32_0 = arith.constant 0 : i32
    return %arg0, %c0_i32 : i32, i32
  }
}

</mosaic_0001>

<llo_original>
// kernel: linkx_forward_padded.1
$region0: #{linkx_forward_padded.1}
  #allocation0 [shape = 'u32[]', space=smem, size = 0x4, offset = 0x4, fixed_abs, tag = 'smem constant byte address 0x4 - core index']
  #allocation1 [shape = 'u32[144,128]{1,0:T(1,128)}', space=vmem, size = 0x12000, scoped, tag = 'internal scratch']
  #allocation2 [shape = 'f32[256,128]{1,0:T(8,128)}', space=vmem, size = 0x20000, scoped, tag = 'scratch operand']
  %s0 = inlined_call_operand.hbm [shape: bf16[512,512], index: 0, kind: input, shape index: {}]
  %s1 = inlined_call_operand.hbm [shape: bf16[512,128], index: 1, kind: input, shape index: {}]
  %s2 = inlined_call_operand.hbm [shape: bf16[512,128], index: 2, kind: input, shape index: {}]
  %s3 = inlined_call_operand.hbm [shape: bf16[128,128], index: 3, kind: input, shape index: {}]
  %s4 = inlined_call_operand.vmem [shape: f32[1,128], index: 4, kind: input, shape index: {}]
  %s5 = inlined_call_operand.hbm [shape: bf16[128,128], index: 5, kind: input, shape index: {}]
  %s6 = inlined_call_operand.vmem [shape: f32[1,128], index: 6, kind: input, shape index: {}]
  %s7 = inlined_call_operand.vmem [shape: f32[512,128], index: 7, kind: output, shape index: {}]
  %s8 = sld [smem:[#allocation0]]
  $region89: #{linkx_forward_padded.1} parent=0
    _
  %s10 = ssub.s32 1, %s8
  %s11 = scalar_select 0, %s10, %s8
  $region1: #{linkx_forward_padded.1} parent=0
    #allocation3 [shape = 'u8[524288]{0}', space=vmem, size = 0x80000, scoped, tag = 'input window, operand 0']
    #allocation4 [shape = 's32[2]{0}', space=sflag, size = 0x8, scoped, tag = 'scoped memory for linkx_forward_padded.1']
    #allocation5 [shape = 'u8[131072]{0}', space=vmem, size = 0x20000, scoped, tag = 'input window, operand 1, single buffered']
    #allocation6 [shape = 's32[1]{0}', space=sflag, size = 0x4, scoped, tag = 'scoped memory for linkx_forward_padded.1']
    #allocation7 [shape = 'u8[131072]{0}', space=vmem, size = 0x20000, scoped, tag = 'input window, operand 2']
    #allocation8 [shape = 'u8[32768]{0}', space=vmem, size = 0x8000, scoped, tag = 'input window, operand 3, single buffered']
    #allocation9 [shape = 'u8[32768]{0}', space=vmem, size = 0x8000, scoped, tag = 'input window, operand 5, single buffered']
    #allocation10 [shape = 's32[1]{0}', space=sflag, size = 0x4, scoped, tag = 'scoped memory for linkx_forward_padded.1']
    %12 = vsyncpa [#allocation4], 0
    %s13 = scalar_lea.sflag [#allocation4], 1
    %14 = vsyncpa %s13, 0
    %15 = vsyncpa [#allocation6], 0
    %16 = vsyncpa [#allocation10], 0
    loop: start=0, step=1, limit=4
    $region2: #{linkx_forward_padded.1} parent=1 // loop_pre_header
      _
    $region3: #{linkx_forward_padded.1} parent=1 // loop_header
      %s18 = sphi 0, %s22
      %p19 = scmp.ge.s32.totalorder %s18, 4
      %s25 = sphi 0, %s37
      %s26 = sphi 0, %s33
      %s27 = sphi 0, %s25
      %s28 = sphi 0, %s26
      %s29 = sphi 0, %s27
      %s30 = sphi 0, %s28
      %s42 = sphi 0, %s44
      %s45 = sphi 0, %s42
      %s46 = sphi 0, %s45
      %s62 = sphi 0, %s46
      %s66 = sphi 0, %s66
      %s68 = sphi 0, %s66
      %s69 = sphi 0, %s68
      %s83 = sphi 0, %s69
      %s89 = sphi 0, %s91
      %s92 = sphi 0, %s89
      %s93 = sphi 0, %s92
      %s109 = sphi 0, %s93
      %s113 = sphi 0, %s113
      %s115 = sphi 0, %s113
      %s116 = sphi 0, %s115
      %s130 = sphi 0, %s116
      %s134 = sphi 0, %s134
      %s136 = sphi 0, %s134
      %s137 = sphi 0, %s136
      %s151 = sphi 0, %s137
      %s155 = sphi 0, %s155
      %s157 = sphi 0, %s155
      %s158 = sphi 0, %s157
      %s172 = sphi 0, %s158
      %s176 = sphi 0, %s176
      %s178 = sphi 0, %s176
      %s179 = sphi 0, %s178
      %s193 = sphi 0, %s179
      %s199 = sphi 0, %s201
      %s202 = sphi 0, %s199
      %s203 = sphi 0, %s202
      %s219 = sphi 0, %s203
    $region4: #{linkx_forward_padded.1} parent=1 // loop_header_branch
      %21 = sbr.rel (%p19) target = $region8
    $region5: #{linkx_forward_padded.1} parent=1 // loop_body
      %s23 = ssub.s32 %s18, 1
      %s24 = ssub.s32 %s18, 2
      %s31 = sadd.s32 1, %s26
      %p32 = scmp.ge.s32.totalorder %s31, 1
      %s33 = scalar_select %p32, 0, %s31
      %s34 = sadd.s32 1, %s25
      %s35 = scalar_select %p32, %s34, %s25
      %p36 = scmp.ge.s32.totalorder %s35, 2
      %s37 = scalar_select %p36, 0, %s35
      %s38 = ssub.s32 %s25, %s37
      %s39 = ssub.s32 %s26, %s33
      %s40 = sor.u32 %s38, %s39
      %p41 = scmp.eq.s32.totalorder %s40, 0
      %s43 = sadd.s32 %s42, 1
      %s44 = scalar_select %p41, %s42, %s43
      %p47 = pneg %p41
      %p48 = scmp.eq.s32.totalorder %s18, 1
      %p49 = por %p47, %p48
      %p50 = scmp.ne.s32.totalorder %s42, %s45
      %p51 = scmp.eq.s32.totalorder %s18, 0
      %p52 = por %p50, %p51
      %p53 = scmp.ne.s32.totalorder %s42, %s45
      %p54 = scmp.eq.s32.totalorder %s23, 1
      %p55 = por %p53, %p54
      %p56 = scmp.ne.s32.totalorder %s45, %s46
      %p57 = scmp.eq.s32.totalorder %s23, 0
      %p58 = por %p56, %p57
      %p59 = scmp.ne.s32.totalorder %s45, %s46
      %p60 = scmp.eq.s32.totalorder %s24, 1
      %p61 = por %p59, %p60
      %p63 = scmp.ne.s32.totalorder %s46, %s62
      %p64 = scmp.eq.s32.totalorder %s24, 0
      %p65 = por %p63, %p64
      %s67 = sadd.s32 %s66, 1
      %p70 = scmp.eq.s32.totalorder %s18, 1
      %p71 = scmp.ne.s32.totalorder %s66, %s68
      %p72 = scmp.eq.s32.totalorder %s18, 0
      %p73 = por %p71, %p72
      %p74 = scmp.ne.s32.totalorder %s66, %s68
      %p75 = scmp.eq.s32.totalorder %s23, 1
      %p76 = por %p74, %p75
      %p77 = scmp.ne.s32.totalorder %s68, %s69
      %p78 = scmp.eq.s32.totalorder %s23, 0
      %p79 = por %p77, %p78
      %p80 = scmp.ne.s32.totalorder %s68, %s69
      %p81 = scmp.eq.s32.totalorder %s24, 1
      %p82 = por %p80, %p81
      %p84 = scmp.ne.s32.totalorder %s69, %s83
      %p85 = scmp.eq.s32.totalorder %s24, 0
      %p86 = por %p84, %p85
      %s87 = ssub.s32 %s25, %s37
      %p88 = scmp.eq.s32.totalorder %s87, 0
      %s90 = sadd.s32 %s89, 1
      %s91 = scalar_select %p88, %s89, %s90
      %p94 = pneg %p88
      %p95 = scmp.eq.s32.totalorder %s18, 1
      %p96 = por %p94, %p95
      %p97 = scmp.ne.s32.totalorder %s89, %s92
      %p98 = scmp.eq.s32.totalorder %s18, 0
      %p99 = por %p97, %p98
      %p100 = scmp.ne.s32.totalorder %s89, %s92
      %p101 = scmp.eq.s32.totalorder %s23, 1
      %p102 = por %p100, %p101
      %p103 = scmp.ne.s32.totalorder %s92, %s93
      %p104 = scmp.eq.s32.totalorder %s23, 0
      %p105 = por %p103, %p104
      %p106 = scmp.ne.s32.totalorder %s92, %s93
      %p107 = scmp.eq.s32.totalorder %s24, 1
      %p108 = por %p106, %p107
      %p110 = scmp.ne.s32.totalorder %s93, %s109
      %p111 = scmp.eq.s32.totalorder %s24, 0
      %p112 = por %p110, %p111
      %s114 = sadd.s32 %s113, 1
      %p117 = scmp.eq.s32.totalorder %s18, 1
      %p118 = scmp.ne.s32.totalorder %s113, %s115
      %p119 = scmp.eq.s32.totalorder %s18, 0
      %p120 = por %p118, %p119
      %p121 = scmp.ne.s32.totalorder %s113, %s115
      %p122 = scmp.eq.s32.totalorder %s23, 1
      %p123 = por %p121, %p122
      %p124 = scmp.ne.s32.totalorder %s115, %s116
      %p125 = scmp.eq.s32.totalorder %s23, 0
      %p126 = por %p124, %p125
      %p127 = scmp.ne.s32.totalorder %s115, %s116
      %p128 = scmp.eq.s32.totalorder %s24, 1
      %p129 = por %p127, %p128
      %p131 = scmp.ne.s32.totalorder %s116, %s130
      %p132 = scmp.eq.s32.totalorder %s24, 0
      %p133 = por %p131, %p132
      %s135 = sadd.s32 %s134, 1
      %p138 = scmp.eq.s32.totalorder %s18, 1
      %p139 = scmp.ne.s32.totalorder %s134, %s136
      %p140 = scmp.eq.s32.totalorder %s18, 0
      %p141 = por %p139, %p140
      %p142 = scmp.ne.s32.totalorder %s134, %s136
      %p143 = scmp.eq.s32.totalorder %s23, 1
      %p144 = por %p142, %p143
      %p145 = scmp.ne.s32.totalorder %s136, %s137
      %p146 = scmp.eq.s32.totalorder %s23, 0
      %p147 = por %p145, %p146
      %p148 = scmp.ne.s32.totalorder %s136, %s137
      %p149 = scmp.eq.s32.totalorder %s24, 1
      %p150 = por %p148, %p149
      %p152 = scmp.ne.s32.totalorder %s137, %s151
      %p153 = scmp.eq.s32.totalorder %s24, 0
      %p154 = por %p152, %p153
      %s156 = sadd.s32 %s155, 1
      %p159 = scmp.eq.s32.totalorder %s18, 1
      %p160 = scmp.ne.s32.totalorder %s155, %s157
      %p161 = scmp.eq.s32.totalorder %s18, 0
      %p162 = por %p160, %p161
      %p163 = scmp.ne.s32.totalorder %s155, %s157
      %p164 = scmp.eq.s32.totalorder %s23, 1
      %p165 = por %p163, %p164
      %p166 = scmp.ne.s32.totalorder %s157, %s158
      %p167 = scmp.eq.s32.totalorder %s23, 0
      %p168 = por %p166, %p167
      %p169 = scmp.ne.s32.totalorder %s157, %s158
      %p170 = scmp.eq.s32.totalorder %s24, 1
      %p171 = por %p169, %p170
      %p173 = scmp.ne.s32.totalorder %s158, %s172
      %p174 = scmp.eq.s32.totalorder %s24, 0
      %p175 = por %p173, %p174
      %s177 = sadd.s32 %s176, 1
      %p180 = scmp.eq.s32.totalorder %s18, 1
      %p181 = scmp.ne.s32.totalorder %s176, %s178
      %p182 = scmp.eq.s32.totalorder %s18, 0
      %p183 = por %p181, %p182
      %p184 = scmp.ne.s32.totalorder %s176, %s178
      %p185 = scmp.eq.s32.totalorder %s23, 1
      %p186 = por %p184, %p185
      %p187 = scmp.ne.s32.totalorder %s178, %s179
      %p188 = scmp.eq.s32.totalorder %s23, 0
      %p189 = por %p187, %p188
      %p190 = scmp.ne.s32.totalorder %s178, %s179
      %p191 = scmp.eq.s32.totalorder %s24, 1
      %p192 = por %p190, %p191
      %p194 = scmp.ne.s32.totalorder %s179, %s193
      %p195 = scmp.eq.s32.totalorder %s24, 0
      %p196 = por %p194, %p195
      %s197 = ssub.s32 %s25, %s37
      %p198 = scmp.eq.s32.totalorder %s197, 0
      %s200 = sadd.s32 %s199, 1
      %s201 = scalar_select %p198, %s199, %s200
      %p204 = pneg %p198
      %p205 = scmp.eq.s32.totalorder %s18, 1
      %p206 = por %p204, %p205
      %p207 = scmp.ne.s32.totalorder %s199, %s202
      %p208 = scmp.eq.s32.totalorder %s18, 0
      %p209 = por %p207, %p208
      %p210 = scmp.ne.s32.totalorder %s199, %s202
      %p211 = scmp.eq.s32.totalorder %s23, 1
      %p212 = por %p210, %p211
      %p213 = scmp.ne.s32.totalorder %s202, %s203
      %p214 = scmp.eq.s32.totalorder %s23, 0
      %p215 = por %p213, %p214
      %p216 = scmp.ne.s32.totalorder %s202, %s203
      %p217 = scmp.eq.s32.totalorder %s24, 1
      %p218 = por %p216, %p217
      %p220 = scmp.ne.s32.totalorder %s203, %s219
      %p221 = scmp.eq.s32.totalorder %s24, 0
      %p222 = por %p220, %p221
      %p223 = scmp.le.s32.totalorder 1, %s18
      %p224 = scmp.lt.s32.totalorder %s18, 3
      %p225 = pnand %p223, %p224
      %p226 = pneg %p225
      // Predicated region
      $region9: #{linkx_forward_padded.1} parent=5 // pred_check
        _
      $region10: #{linkx_forward_padded.1} parent=5 // pred_check_branch
        %228 = sbr.rel (%p225) target = $region12
      $region11: #{linkx_forward_padded.1} parent=5 // pred_region
        %s229 = ssub.s32 %s18, 1
        // Predicated region
        $region13: #{linkx_forward_padded.1} parent=11 // pred_check
          %p230 = pneg %p79
        $region14: #{linkx_forward_padded.1} parent=11 // pred_check_branch
          %232 = sbr.rel (%p230) target = $region16
        $region15: #{linkx_forward_padded.1} parent=11 // pred_region
          %s234 = ssub.s32 4096, 4096
          %235 = vsyncadd [#allocation6], %s234
          %s236 = sshll.u32 [#allocation5], 4
          %s237 = int_to_ptr.vmem [resolvable:$true] %s236
          %242 = dma.hbm_to_vmem [thread:$0]  %s1, 4096, %s237, [#allocation6], 64, 64, 4
        $region16: #{linkx_forward_padded.1} parent=11 // pred_fallthru
          _
        // Predicated region
        $region17: #{linkx_forward_padded.1} parent=11 // pred_check
          %p243 = pneg %p126
        $region18: #{linkx_forward_padded.1} parent=11 // pred_check_branch
          %245 = sbr.rel (%p243) target = $region20
        $region19: #{linkx_forward_padded.1} parent=11 // pred_region
          %s247 = ssub.s32 1024, 1024
          %248 = vsyncadd [#allocation6], %s247
          %s249 = sshll.u32 [#allocation8], 4
          %s250 = int_to_ptr.vmem [resolvable:$true] %s249
          %255 = dma.hbm_to_vmem [thread:$0]  %s3, 1024, %s250, [#allocation6], 64, 64, 4
        $region20: #{linkx_forward_padded.1} parent=11 // pred_fallthru
          _
        // Predicated region
        $region21: #{linkx_forward_padded.1} parent=11 // pred_check
          %p256 = pneg %p147
        $region22: #{linkx_forward_padded.1} parent=11 // pred_check_branch
          %258 = sbr.rel (%p256) target = $region24
        $region23: #{linkx_forward_padded.1} parent=11 // pred_region
          _
        $region24: #{linkx_forward_padded.1} parent=11 // pred_fallthru
          _
        // Predicated region
        $region25: #{linkx_forward_padded.1} parent=11 // pred_check
          %p259 = pneg %p168
        $region26: #{linkx_forward_padded.1} parent=11 // pred_check_branch
          %261 = sbr.rel (%p259) target = $region28
        $region27: #{linkx_forward_padded.1} parent=11 // pred_region
          %s263 = ssub.s32 1024, 1024
          %264 = vsyncadd [#allocation10], %s263
          %s265 = sshll.u32 [#allocation9], 4
          %s266 = int_to_ptr.vmem [resolvable:$true] %s265
          %271 = dma.hbm_to_vmem [thread:$0]  %s5, 1024, %s266, [#allocation10], 64, 64, 4
        $region28: #{linkx_forward_padded.1} parent=11 // pred_fallthru
          _
        // Predicated region
        $region29: #{linkx_forward_padded.1} parent=11 // pred_check
          %p272 = pneg %p189
        $region30: #{linkx_forward_padded.1} parent=11 // pred_check_branch
          %274 = sbr.rel (%p272) target = $region32
        $region31: #{linkx_forward_padded.1} parent=11 // pred_region
          _
        $region32: #{linkx_forward_padded.1} parent=11 // pred_fallthru
          _
      $region12: #{linkx_forward_padded.1} parent=5 // pred_fallthru
        _
      %p275 = scmp.lt.s32.totalorder %s18, 2
      // Predicated region
      $region33: #{linkx_forward_padded.1} parent=5 // pred_check
        %p276 = pneg %p275
      $region34: #{linkx_forward_padded.1} parent=5 // pred_check_branch
        %278 = sbr.rel (%p276) target = $region36
      $region35: #{linkx_forward_padded.1} parent=5 // pred_region
        // Predicated region
        $region37: #{linkx_forward_padded.1} parent=35 // pred_check
          %p279 = pneg %p52
        $region38: #{linkx_forward_padded.1} parent=35 // pred_check_branch
          %281 = sbr.rel (%p279) target = $region40
        $region39: #{linkx_forward_padded.1} parent=35 // pred_region
          %s282 = sand.u32 %s18, 1
          %s283 = scalar_lea.sflag [#allocation4], %s282
          %s284 = sand.u32 %s42, 1
          %s285 = smul.addr %s284, 512
          %s286 = scalar_lea.vmem [#allocation3], %s285
          %s287 = smul.u32 32, %s25
          %s288 = smul.u32 4, %s26
          %s290 = ssub.s32 8192, 8192
          %291 = vsyncadd %s283, %s290
          %s292 = smul.addr %s287, 4
          %s293 = sadd.s32 %s288, %s292
          %s294 = smul.addr %s293, 64
          %s295 = scalar_lea.hbm %s0, %s294
          %s296 = sshll.u32 %s286, 4
          %s297 = int_to_ptr.vmem [resolvable:$true] %s296
          %302 = dma.hbm_to_vmem [thread:$0]  %s295, 8192, %s297, %s283, 256, 256, 16
        $region40: #{linkx_forward_padded.1} parent=35 // pred_fallthru
          _
        // Predicated region
        $region41: #{linkx_forward_padded.1} parent=35 // pred_check
          %p303 = pneg %p99
        $region42: #{linkx_forward_padded.1} parent=35 // pred_check_branch
          %305 = sbr.rel (%p303) target = $region44
        $region43: #{linkx_forward_padded.1} parent=35 // pred_region
          %s306 = sand.u32 %s18, 1
          %s307 = scalar_lea.sflag [#allocation4], %s306
          %s308 = sand.u32 %s89, 1
          %s309 = smul.addr %s308, 128
          %s310 = scalar_lea.vmem [#allocation7], %s309
          %s311 = smul.u32 32, %s25
          %s313 = ssub.s32 2048, 2048
          %314 = vsyncadd %s307, %s313
          %s315 = smul.addr %s311, 64
          %s316 = scalar_lea.hbm %s2, %s315
          %s317 = sshll.u32 %s310, 4
          %s318 = int_to_ptr.vmem [resolvable:$true] %s317
          %323 = dma.hbm_to_vmem [thread:$0]  %s316, 2048, %s318, %s307, 64, 64, 4
        $region44: #{linkx_forward_padded.1} parent=35 // pred_fallthru
          _
      $region36: #{linkx_forward_padded.1} parent=5 // pred_fallthru
        _
      %p324 = scmp.le.s32.totalorder 1, %s18
      %p325 = scmp.lt.s32.totalorder %s18, 3
      %p326 = pnand %p324, %p325
      %p327 = pneg %p326
      // Predicated region
      $region45: #{linkx_forward_padded.1} parent=5 // pred_check
        _
      $region46: #{linkx_forward_padded.1} parent=5 // pred_check_branch
        %329 = sbr.rel (%p326) target = $region48
      $region47: #{linkx_forward_padded.1} parent=5 // pred_region
        %s330 = ssub.s32 %s18, 1
        %s331 = sand.u32 %s23, 1
        %s332 = scalar_lea.sflag [#allocation4], %s331
        %s333 = sand.u32 %s45, 1
        %s334 = smul.addr %s333, 512
        %s335 = scalar_lea.vmem [#allocation3], %s334
        // Predicated region
        $region49: #{linkx_forward_padded.1} parent=47 // pred_check
          %p336 = pneg %p58
        $region50: #{linkx_forward_padded.1} parent=47 // pred_check_branch
          %338 = sbr.rel (%p336) target = $region52
        $region51: #{linkx_forward_padded.1} parent=47 // pred_region
          %339 = dma.done %s332, 8192
        $region52: #{linkx_forward_padded.1} parent=47 // pred_fallthru
          _
        // Predicated region
        $region53: #{linkx_forward_padded.1} parent=47 // pred_check
          %p340 = pneg %p79
        $region54: #{linkx_forward_padded.1} parent=47 // pred_check_branch
          %342 = sbr.rel (%p340) target = $region56
        $region55: #{linkx_forward_padded.1} parent=47 // pred_region
          %343 = dma.done [#allocation6], 4096
        $region56: #{linkx_forward_padded.1} parent=47 // pred_fallthru
          _
        %s344 = sand.u32 %s23, 1
        %s345 = scalar_lea.sflag [#allocation4], %s344
        %s346 = sand.u32 %s92, 1
        %s347 = smul.addr %s346, 128
        %s348 = scalar_lea.vmem [#allocation7], %s347
        // Predicated region
        $region57: #{linkx_forward_padded.1} parent=47 // pred_check
          %p349 = pneg %p105
        $region58: #{linkx_forward_padded.1} parent=47 // pred_check_branch
          %351 = sbr.rel (%p349) target = $region60
        $region59: #{linkx_forward_padded.1} parent=47 // pred_region
          %352 = dma.done %s345, 2048
        $region60: #{linkx_forward_padded.1} parent=47 // pred_fallthru
          _
        // Predicated region
        $region61: #{linkx_forward_padded.1} parent=47 // pred_check
          %p353 = pneg %p126
        $region62: #{linkx_forward_padded.1} parent=47 // pred_check_branch
          %355 = sbr.rel (%p353) target = $region64
        $region63: #{linkx_forward_padded.1} parent=47 // pred_region
          %356 = dma.done [#allocation6], 1024
        $region64: #{linkx_forward_padded.1} parent=47 // pred_fallthru
          _
        // Predicated region
        $region65: #{linkx_forward_padded.1} parent=47 // pred_check
          %p357 = pneg %p168
        $region66: #{linkx_forward_padded.1} parent=47 // pred_check_branch
          %359 = sbr.rel (%p357) target = $region68
        $region67: #{linkx_forward_padded.1} parent=47 // pred_region
          %360 = dma.done [#allocation10], 1024
        $region68: #{linkx_forward_padded.1} parent=47 // pred_fallthru
          _
        %s361 = sand.u32 %s23, 1
        %s362 = scalar_lea.sflag [#allocation4], %s361
        %s363 = sand.u32 %s45, 1
        %s364 = smul.addr %s363, 512
        %s365 = scalar_lea.vmem [#allocation3], %s364
        %p366 = pneg %p58
        %p367 = pneg %p55
        %p368 = pneg %p79
        %p369 = pneg %p76
        %s370 = sand.u32 %s23, 1
        %s371 = scalar_lea.sflag [#allocation4], %s370
        %s372 = sand.u32 %s92, 1
        %s373 = smul.addr %s372, 128
        %s374 = scalar_lea.vmem [#allocation7], %s373
        %p375 = pneg %p105
        %p376 = pneg %p102
        %p377 = pneg %p126
        %p378 = pneg %p123
        %p379 = pneg %p147
        %p380 = pneg %p144
        %p381 = pneg %p168
        %p382 = pneg %p165
        %p383 = pneg %p189
        %p384 = pneg %p186
        %p385 = pneg %p215
        %p386 = pneg %p212
        %s387 = smul.u32 32, %s27
        %p388 = scmp.lt.s32.totalorder %s387, 63
        %s389 = scalar_select %p388, %s387, 63
        %s390 = smul.addr %s389, 8
        %s391 = scalar_lea.vmem %s7, %s390
        %s392 = smul.u32 32, %s27
        %s393 = smul.u32 4, %s28
        %s394 = smul.u32 32, %s27
        %s395 = smul.u32 32, %s27
        %p396 = scmp.lt.s32.totalorder %s395, 63
        %s397 = scalar_select %p396, %s395, 63
        %s398 = smul.addr %s397, 8
        %s399 = scalar_lea.vmem %s7, %s398
        %s400 = smul.u32 32, %s27
        %p402 = scmp.eq.s32.totalorder %s28, 0
        // Predicated region
        $region69: #{linkx_forward_padded.1} parent=47 // pred_check
          %p403 = pneg %p402
        $region70: #{linkx_forward_padded.1} parent=47 // pred_check_branch
          %405 = sbr.rel (%p403) target = $region72
        $region71: #{linkx_forward_padded.1} parent=47 // pred_region
          %v406 = vld [vmem:[%s348] sm:$0xf]
          %v407 = vld [vmem:[%s348 + $0x4] sm:$0xf]
          %v408 = vld [vmem:[%s348 + $0x8] sm:$0xf]
          %v409 = vld [vmem:[%s348 + $0xc] sm:$0xf]
          %v410 = vld [vmem:[%s348 + $0x10] sm:$0xf]
          %v411 = vld [vmem:[%s348 + $0x14] sm:$0xf]
          %v412 = vld [vmem:[%s348 + $0x18] sm:$0xf]
          %v413 = vld [vmem:[%s348 + $0x1c] sm:$0xf]
          %v414 = vld [vmem:[%s348 + $0x20] sm:$0xf]
          %v415 = vld [vmem:[%s348 + $0x24] sm:$0xf]
          %v416 = vld [vmem:[%s348 + $0x28] sm:$0xf]
          %v417 = vld [vmem:[%s348 + $0x2c] sm:$0xf]
          %v418 = vld [vmem:[%s348 + $0x30] sm:$0xf]
          %v419 = vld [vmem:[%s348 + $0x34] sm:$0xf]
          %v420 = vld [vmem:[%s348 + $0x38] sm:$0xf]
          %v421 = vld [vmem:[%s348 + $0x3c] sm:$0xf]
          %v422 = vld [vmem:[%s348 + $0x40] sm:$0xf]
          %v423 = vld [vmem:[%s348 + $0x44] sm:$0xf]
          %v424 = vld [vmem:[%s348 + $0x48] sm:$0xf]
          %v425 = vld [vmem:[%s348 + $0x4c] sm:$0xf]
          %v426 = vld [vmem:[%s348 + $0x50] sm:$0xf]
          %v427 = vld [vmem:[%s348 + $0x54] sm:$0xf]
          %v428 = vld [vmem:[%s348 + $0x58] sm:$0xf]
          %v429 = vld [vmem:[%s348 + $0x5c] sm:$0xf]
          %v430 = vld [vmem:[%s348 + $0x60] sm:$0xf]
          %v431 = vld [vmem:[%s348 + $0x64] sm:$0xf]
          %v432 = vld [vmem:[%s348 + $0x68] sm:$0xf]
          %v433 = vld [vmem:[%s348 + $0x6c] sm:$0xf]
          %v434 = vld [vmem:[%s348 + $0x70] sm:$0xf]
          %v435 = vld [vmem:[%s348 + $0x74] sm:$0xf]
          %v436 = vld [vmem:[%s348 + $0x78] sm:$0xf]
          %v437 = vld [vmem:[%s348 + $0x7c] sm:$0xf]
          %v438 = vld [vmem:[#allocation8] sm:$0xf]
          %v439 = vld [vmem:[#allocation8 + $0x4] sm:$0xf]
          %v440 = vld [vmem:[#allocation8 + $0x8] sm:$0xf]
          %v441 = vld [vmem:[#allocation8 + $0xc] sm:$0xf]
          %v442 = vld [vmem:[#allocation8 + $0x10] sm:$0xf]
          %v443 = vld [vmem:[#allocation8 + $0x14] sm:$0xf]
          %v444 = vld [vmem:[#allocation8 + $0x18] sm:$0xf]
          %v445 = vld [vmem:[#allocation8 + $0x1c] sm:$0xf]
          %v446 = vld [vmem:[#allocation8 + $0x20] sm:$0xf]
          %v447 = vld [vmem:[#allocation8 + $0x24] sm:$0xf]
          %v448 = vld [vmem:[#allocation8 + $0x28] sm:$0xf]
          %v449 = vld [vmem:[#allocation8 + $0x2c] sm:$0xf]
          %v450 = vld [vmem:[#allocation8 + $0x30] sm:$0xf]
          %v451 = vld [vmem:[#allocation8 + $0x34] sm:$0xf]
          %v452 = vld [vmem:[#allocation8 + $0x38] sm:$0xf]
          %v453 = vld [vmem:[#allocation8 + $0x3c] sm:$0xf]
          %v454 = vld [vmem:[%s4] sm:$0x1]
          %v456 = vlaneseq
          %v457 = vshrl.u32 %v456, 7
          %v458 = vsub.s32 0, %v457
          %v459 = vrot.slane %v454, %v458
          %v493 = vunpack.c.l.b16 %v406
          %v494 = vunpack.c.l.b16 %v407
          %v495 = vunpack.c.l.b16 %v408
          %v496 = vunpack.c.l.b16 %v409
          %v497 = vunpack.c.l.b16 %v410
          %v498 = vunpack.c.l.b16 %v411
          %v499 = vunpack.c.l.b16 %v412
          %v500 = vunpack.c.l.b16 %v413
          %v501 = vunpack.c.l.b16 %v414
          %v502 = vunpack.c.l.b16 %v415
          %v503 = vunpack.c.l.b16 %v416
          %v504 = vunpack.c.l.b16 %v417
          %v505 = vunpack.c.l.b16 %v418
          %v506 = vunpack.c.l.b16 %v419
          %v507 = vunpack.c.l.b16 %v420
          %v508 = vunpack.c.l.b16 %v421
          %v509 = vunpack.c.l.b16 %v422
          %v510 = vunpack.c.l.b16 %v423
          %v511 = vunpack.c.l.b16 %v424
          %v512 = vunpack.c.l.b16 %v425
          %v513 = vunpack.c.l.b16 %v426
          %v514 = vunpack.c.l.b16 %v427
          %v515 = vunpack.c.l.b16 %v428
          %v516 = vunpack.c.l.b16 %v429
          %v517 = vunpack.c.l.b16 %v430
          %v518 = vunpack.c.l.b16 %v431
          %v519 = vunpack.c.l.b16 %v432
          %v520 = vunpack.c.l.b16 %v433
          %v521 = vunpack.c.l.b16 %v434
          %v522 = vunpack.c.l.b16 %v435
          %v523 = vunpack.c.l.b16 %v436
          %v524 = vunpack.c.l.b16 %v437
          %v525 = vpack.c.b16 %v494, %v493
          %v526 = vpack.c.b16 %v496, %v495
          %v527 = vpack.c.b16 %v498, %v497
          %v528 = vpack.c.b16 %v500, %v499
          %v529 = vpack.c.b16 %v502, %v501
          %v530 = vpack.c.b16 %v504, %v503
          %v531 = vpack.c.b16 %v506, %v505
          %v532 = vpack.c.b16 %v508, %v507
          %v533 = vpack.c.b16 %v510, %v509
          %v534 = vpack.c.b16 %v512, %v511
          %v535 = vpack.c.b16 %v514, %v513
          %v536 = vpack.c.b16 %v516, %v515
          %v537 = vpack.c.b16 %v518, %v517
          %v538 = vpack.c.b16 %v520, %v519
          %v539 = vpack.c.b16 %v522, %v521
          %v540 = vpack.c.b16 %v524, %v523
          %v573 = vunpack.c.l.b16 %v438
          %v574 = vunpack.c.l.b16 %v439
          %v575 = vunpack.c.l.b16 %v440
          %v576 = vunpack.c.l.b16 %v441
          %v577 = vunpack.c.l.b16 %v442
          %v578 = vunpack.c.l.b16 %v443
          %v579 = vunpack.c.l.b16 %v444
          %v580 = vunpack.c.l.b16 %v445
          %v581 = vunpack.c.l.b16 %v446
          %v582 = vunpack.c.l.b16 %v447
          %v583 = vunpack.c.l.b16 %v448
          %v584 = vunpack.c.l.b16 %v449
          %v585 = vunpack.c.l.b16 %v450
          %v586 = vunpack.c.l.b16 %v451
          %v587 = vunpack.c.l.b16 %v452
          %v588 = vunpack.c.l.b16 %v453
          %v589 = vpack.c.b16 %v574, %v573
          %v590 = vpack.c.b16 %v576, %v575
          %v591 = vpack.c.b16 %v578, %v577
          %v592 = vpack.c.b16 %v580, %v579
          %v593 = vpack.c.b16 %v582, %v581
          %v594 = vpack.c.b16 %v584, %v583
          %v595 = vpack.c.b16 %v586, %v585
          %v596 = vpack.c.b16 %v588, %v587
          %605 = vmatprep.subr.bf16.mxu0 0
          %606 = vmatpush1.bf16.msra.mxu0 %v589
          %607 = vmatprep.subr.bf16.mxu0 0
          %608 = vmatpush1.bf16.msra.mxu0 %v590
          %609 = vmatprep.subr.bf16.mxu0 0
          %610 = vmatpush1.bf16.msra.mxu0 %v591
          %611 = vmatprep.subr.bf16.mxu0 0
          %612 = vmatpush1.bf16.msra.mxu0 %v592
          %613 = vmatprep.subr.bf16.mxu0 0
          %614 = vmatpush1.bf16.msra.mxu0 %v593
          %615 = vmatprep.subr.bf16.mxu0 0
          %616 = vmatpush1.bf16.msra.mxu0 %v594
          %617 = vmatprep.subr.bf16.mxu0 0
          %618 = vmatpush1.bf16.msra.mxu0 %v595
          %619 = vmatprep.subr.bf16.mxu0 0
          %620 = vmatpush1.bf16.msra.mxu0 %v596
          %621 = vmatprep.subr.bf16.mxu0 0
          %622 = vmatpush1.bf16.msra.mxu0 0
          %623 = vmatprep.subr.bf16.mxu0 0
          %624 = vmatpush1.bf16.msra.mxu0 0
          %625 = vmatprep.subr.bf16.mxu0 0
          %626 = vmatpush1.bf16.msra.mxu0 0
          %627 = vmatprep.subr.bf16.mxu0 0
          %628 = vmatpush1.bf16.msra.mxu0 0
          %629 = vmatprep.subr.bf16.mxu0 0
          %630 = vmatpush1.bf16.msra.mxu0 0
          %631 = vmatprep.subr.bf16.mxu0 0
          %632 = vmatpush1.bf16.msra.mxu0 0
          %633 = vmatprep.subr.bf16.mxu0 0
          %634 = vmatpush1.bf16.msra.mxu0 0
          %635 = vmatprep.subr.bf16.mxu0 0
          %636 = vmatpush1.bf16.msra.mxu0 0
          %637 = vmatprep.mubr.bf16.mxu0 0
          %638 = vmatmul.mubr.bf16.gmra.mrb[0].mxu0 %v525
          %v639 = vpop.f32.mrb[0].mxu0
          %v640 = vadd.f32 %v459, %v639
          %v641 = vpop.f32.mrb[0].mxu0
          %v642 = vpop.f32.mrb[0].mxu0
          %v643 = vadd.f32 %v459, %v642
          %v644 = vpop.f32.mrb[0].mxu0
          %645 = vmatprep.mubr.bf16.mxu0 0
          %646 = vmatmul.mubr.bf16.gmra.mrb[0].mxu0 %v526
          %v647 = vpop.f32.mrb[0].mxu0
          %v648 = vadd.f32 %v459, %v647
          %v649 = vpop.f32.mrb[0].mxu0
          %v650 = vpop.f32.mrb[0].mxu0
          %v651 = vadd.f32 %v459, %v650
          %v652 = vpop.f32.mrb[0].mxu0
          %653 = vmatprep.mubr.bf16.mxu0 0
          %654 = vmatmul.mubr.bf16.gmra.mrb[0].mxu0 %v527
          %v655 = vpop.f32.mrb[0].mxu0
          %v656 = vadd.f32 %v459, %v655
          %v657 = vpop.f32.mrb[0].mxu0
          %v658 = vpop.f32.mrb[0].mxu0
          %v659 = vadd.f32 %v459, %v658
          %v660 = vpop.f32.mrb[0].mxu0
          %661 = vmatprep.mubr.bf16.mxu0 0
          %662 = vmatmul.mubr.bf16.gmra.mrb[0].mxu0 %v528
          %v663 = vpop.f32.mrb[0].mxu0
          %v664 = vadd.f32 %v459, %v663
          %v665 = vpop.f32.mrb[0].mxu0
          %v666 = vpop.f32.mrb[0].mxu0
          %v667 = vadd.f32 %v459, %v666
          %v668 = vpop.f32.mrb[0].mxu0
          %669 = vmatprep.mubr.bf16.mxu0 0
          %670 = vmatmul.mubr.bf16.gmra.mrb[0].mxu0 %v529
          %v671 = vpop.f32.mrb[0].mxu0
          %v672 = vadd.f32 %v459, %v671
          %v673 = vpop.f32.mrb[0].mxu0
          %v674 = vpop.f32.mrb[0].mxu0
          %v675 = vadd.f32 %v459, %v674
          %v676 = vpop.f32.mrb[0].mxu0
          %677 = vmatprep.mubr.bf16.mxu0 0
          %678 = vmatmul.mubr.bf16.gmra.mrb[0].mxu0 %v530
          %v679 = vpop.f32.mrb[0].mxu0
          %v680 = vadd.f32 %v459, %v679
          %v681 = vpop.f32.mrb[0].mxu0
          %v682 = vpop.f32.mrb[0].mxu0
          %v683 = vadd.f32 %v459, %v682
          %v684 = vpop.f32.mrb[0].mxu0
          %685 = vmatprep.mubr.bf16.mxu0 0
          %686 = vmatmul.mubr.bf16.gmra.mrb[0].mxu0 %v531
          %v687 = vpop.f32.mrb[0].mxu0
          %v688 = vadd.f32 %v459, %v687
          %v689 = vpop.f32.mrb[0].mxu0
          %v690 = vpop.f32.mrb[0].mxu0
          %v691 = vadd.f32 %v459, %v690
          %v692 = vpop.f32.mrb[0].mxu0
          %693 = vmatprep.mubr.bf16.mxu0 0
          %694 = vmatmul.mubr.bf16.gmra.mrb[0].mxu0 %v532
          %v695 = vpop.f32.mrb[0].mxu0
          %v696 = vadd.f32 %v459, %v695
          %v697 = vpop.f32.mrb[0].mxu0
          %v698 = vpop.f32.mrb[0].mxu0
          %v699 = vadd.f32 %v459, %v698
          %v700 = vpop.f32.mrb[0].mxu0
          %701 = vmatprep.mubr.bf16.mxu0 0
          %702 = vmatmul.mubr.bf16.gmra.mrb[0].mxu0 %v533
          %v703 = vpop.f32.mrb[0].mxu0
          %v704 = vadd.f32 %v459, %v703
          %v705 = vpop.f32.mrb[0].mxu0
          %v706 = vpop.f32.mrb[0].mxu0
          %v707 = vadd.f32 %v459, %v706
          %v708 = vpop.f32.mrb[0].mxu0
          %709 = vmatprep.mubr.bf16.mxu0 0
          %710 = vmatmul.mubr.bf16.gmra.mrb[0].mxu0 %v534
          %v711 = vpop.f32.mrb[0].mxu0
          %v712 = vadd.f32 %v459, %v711
          %v713 = vpop.f32.mrb[0].mxu0
          %v714 = vpop.f32.mrb[0].mxu0
          %v715 = vadd.f32 %v459, %v714
          %v716 = vpop.f32.mrb[0].mxu0
          %717 = vmatprep.mubr.bf16.mxu0 0
          %718 = vmatmul.mubr.bf16.gmra.mrb[0].mxu0 %v535
          %v719 = vpop.f32.mrb[0].mxu0
          %v720 = vadd.f32 %v459, %v719
          %v721 = vpop.f32.mrb[0].mxu0
          %v722 = vpop.f32.mrb[0].mxu0
          %v723 = vadd.f32 %v459, %v722
          %v724 = vpop.f32.mrb[0].mxu0
          %725 = vmatprep.mubr.bf16.mxu0 0
          %726 = vmatmul.mubr.bf16.gmra.mrb[0].mxu0 %v536
          %v727 = vpop.f32.mrb[0].mxu0
          %v728 = vadd.f32 %v459, %v727
          %v729 = vpop.f32.mrb[0].mxu0
          %v730 = vpop.f32.mrb[0].mxu0
          %v731 = vadd.f32 %v459, %v730
          %v732 = vpop.f32.mrb[0].mxu0
          %733 = vmatprep.mubr.bf16.mxu0 0
          %734 = vmatmul.mubr.bf16.gmra.mrb[0].mxu0 %v537
          %v735 = vpop.f32.mrb[0].mxu0
          %v736 = vadd.f32 %v459, %v735
          %v737 = vpop.f32.mrb[0].mxu0
          %v738 = vpop.f32.mrb[0].mxu0
          %v739 = vadd.f32 %v459, %v738
          %v740 = vpop.f32.mrb[0].mxu0
          %741 = vmatprep.mubr.bf16.mxu0 0
          %742 = vmatmul.mubr.bf16.gmra.mrb[0].mxu0 %v538
          %v743 = vpop.f32.mrb[0].mxu0
          %v744 = vadd.f32 %v459, %v743
          %v745 = vpop.f32.mrb[0].mxu0
          %v746 = vpop.f32.mrb[0].mxu0
          %v747 = vadd.f32 %v459, %v746
          %v748 = vpop.f32.mrb[0].mxu0
          %749 = vmatprep.mubr.bf16.mxu0 0
          %750 = vmatmul.mubr.bf16.gmra.mrb[0].mxu0 %v539
          %v751 = vpop.f32.mrb[0].mxu0
          %v752 = vadd.f32 %v459, %v751
          %v753 = vpop.f32.mrb[0].mxu0
          %v754 = vpop.f32.mrb[0].mxu0
          %v755 = vadd.f32 %v459, %v754
          %v756 = vpop.f32.mrb[0].mxu0
          %757 = vmatprep.mubr.bf16.mxu0 0
          %758 = vmatmul.mubr.bf16.gmra.mrb[0].mxu0 %v540
          %v759 = vpop.f32.mrb[0].mxu0
          %v760 = vadd.f32 %v459, %v759
          %v761 = vpop.f32.mrb[0].mxu0
          %v762 = vpop.f32.mrb[0].mxu0
          %v763 = vadd.f32 %v459, %v762
          %v764 = vpop.f32.mrb[0].mxu0
          %765 = vdwg.mxu0
          %766 = vst [vmem:[#allocation2] sm:$0xff] %v640
          %767 = vst [vmem:[#allocation2 + $0x8] sm:$0xff] %v643
          %768 = vst [vmem:[#allocation2 + $0x10] sm:$0xff] %v648
          %769 = vst [vmem:[#allocation2 + $0x18] sm:$0xff] %v651
          %770 = vst [vmem:[#allocation2 + $0x20] sm:$0xff] %v656
          %771 = vst [vmem:[#allocation2 + $0x28] sm:$0xff] %v659
          %772 = vst [vmem:[#allocation2 + $0x30] sm:$0xff] %v664
          %773 = vst [vmem:[#allocation2 + $0x38] sm:$0xff] %v667
          %774 = vst [vmem:[#allocation2 + $0x40] sm:$0xff] %v672
          %775 = vst [vmem:[#allocation2 + $0x48] sm:$0xff] %v675
          %776 = vst [vmem:[#allocation2 + $0x50] sm:$0xff] %v680
          %777 = vst [vmem:[#allocation2 + $0x58] sm:$0xff] %v683
          %778 = vst [vmem:[#allocation2 + $0x60] sm:$0xff] %v688
          %779 = vst [vmem:[#allocation2 + $0x68] sm:$0xff] %v691
          %780 = vst [vmem:[#allocation2 + $0x70] sm:$0xff] %v696
          %781 = vst [vmem:[#allocation2 + $0x78] sm:$0xff] %v699
          %782 = vst [vmem:[#allocation2 + $0x80] sm:$0xff] %v704
          %783 = vst [vmem:[#allocation2 + $0x88] sm:$0xff] %v707
          %784 = vst [vmem:[#allocation2 + $0x90] sm:$0xff] %v712
          %785 = vst [vmem:[#allocation2 + $0x98] sm:$0xff] %v715
          %786 = vst [vmem:[#allocation2 + $0xa0] sm:$0xff] %v720
          %787 = vst [vmem:[#allocation2 + $0xa8] sm:$0xff] %v723
          %788 = vst [vmem:[#allocation2 + $0xb0] sm:$0xff] %v728
          %789 = vst [vmem:[#allocation2 + $0xb8] sm:$0xff] %v731
          %790 = vst [vmem:[#allocation2 + $0xc0] sm:$0xff] %v736
          %791 = vst [vmem:[#allocation2 + $0xc8] sm:$0xff] %v739
          %792 = vst [vmem:[#allocation2 + $0xd0] sm:$0xff] %v744
          %793 = vst [vmem:[#allocation2 + $0xd8] sm:$0xff] %v747
          %794 = vst [vmem:[#allocation2 + $0xe0] sm:$0xff] %v752
          %795 = vst [vmem:[#allocation2 + $0xe8] sm:$0xff] %v755
          %796 = vst [vmem:[#allocation2 + $0xf0] sm:$0xff] %v760
          %797 = vst [vmem:[#allocation2 + $0xf8] sm:$0xff] %v763
        $region72: #{linkx_forward_padded.1} parent=47 // pred_fallthru
          _
        %s798 = smul.u32 %s28, 512
        %s799 = sshra.s32 %s798, 3
        %s800 = sand.u32 %s798, 7
        %s801 = smul.addr %s799, 4
        %s802 = scalar_lea.vmem [#allocation5], %s801
        %v803 = vld [vmem:[%s802] sm:$0xf]
        %v804 = vld [vmem:[%s802 + $0x4] sm:$0xf]
        %v805 = vld [vmem:[%s802 + $0x8] sm:$0xf]
        %v806 = vld [vmem:[%s802 + $0xc] sm:$0xf]
        %v807 = vld [vmem:[%s802 + $0x10] sm:$0xf]
        %v808 = vld [vmem:[%s802 + $0x14] sm:$0xf]
        %v809 = vld [vmem:[%s802 + $0x18] sm:$0xf]
        %v810 = vld [vmem:[%s802 + $0x1c] sm:$0xf]
        %v811 = vld [vmem:[%s802 + $0x20] sm:$0xf]
        %v812 = vld [vmem:[%s802 + $0x24] sm:$0xf]
        %v813 = vld [vmem:[%s802 + $0x28] sm:$0xf]
        %v814 = vld [vmem:[%s802 + $0x2c] sm:$0xf]
        %v815 = vld [vmem:[%s802 + $0x30] sm:$0xf]
        %v816 = vld [vmem:[%s802 + $0x34] sm:$0xf]
        %v817 = vld [vmem:[%s802 + $0x38] sm:$0xf]
        %v818 = vld [vmem:[%s802 + $0x3c] sm:$0xf]
        %v819 = vld [vmem:[%s802 + $0x40] sm:$0xf]
        %v820 = vld [vmem:[%s802 + $0x44] sm:$0xf]
        %v821 = vld [vmem:[%s802 + $0x48] sm:$0xf]
        %v822 = vld [vmem:[%s802 + $0x4c] sm:$0xf]
        %v823 = vld [vmem:[%s802 + $0x50] sm:$0xf]
        %v824 = vld [vmem:[%s802 + $0x54] sm:$0xf]
        %v825 = vld [vmem:[%s802 + $0x58] sm:$0xf]
        %v826 = vld [vmem:[%s802 + $0x5c] sm:$0xf]
        %v827 = vld [vmem:[%s802 + $0x60] sm:$0xf]
        %v828 = vld [vmem:[%s802 + $0x64] sm:$0xf]
        %v829 = vld [vmem:[%s802 + $0x68] sm:$0xf]
        %v830 = vld [vmem:[%s802 + $0x6c] sm:$0xf]
        %v831 = vld [vmem:[%s802 + $0x70] sm:$0xf]
        %v832 = vld [vmem:[%s802 + $0x74] sm:$0xf]
        %v833 = vld [vmem:[%s802 + $0x78] sm:$0xf]
        %v834 = vld [vmem:[%s802 + $0x7c] sm:$0xf]
        %v835 = vld [vmem:[%s802 + $0x80] sm:$0xf]
        %v836 = vld [vmem:[%s802 + $0x84] sm:$0xf]
        %v837 = vld [vmem:[%s802 + $0x88] sm:$0xf]
        %v838 = vld [vmem:[%s802 + $0x8c] sm:$0xf]
        %v839 = vld [vmem:[%s802 + $0x90] sm:$0xf]
        %v840 = vld [vmem:[%s802 + $0x94] sm:$0xf]
        %v841 = vld [vmem:[%s802 + $0x98] sm:$0xf]
        %v842 = vld [vmem:[%s802 + $0x9c] sm:$0xf]
        %v843 = vld [vmem:[%s802 + $0xa0] sm:$0xf]
        %v844 = vld [vmem:[%s802 + $0xa4] sm:$0xf]
        %v845 = vld [vmem:[%s802 + $0xa8] sm:$0xf]
        %v846 = vld [vmem:[%s802 + $0xac] sm:$0xf]
        %v847 = vld [vmem:[%s802 + $0xb0] sm:$0xf]
        %v848 = vld [vmem:[%s802 + $0xb4] sm:$0xf]
        %v849 = vld [vmem:[%s802 + $0xb8] sm:$0xf]
        %v850 = vld [vmem:[%s802 + $0xbc] sm:$0xf]
        %v851 = vld [vmem:[%s802 + $0xc0] sm:$0xf]
        %v852 = vld [vmem:[%s802 + $0xc4] sm:$0xf]
        %v853 = vld [vmem:[%s802 + $0xc8] sm:$0xf]
        %v854 = vld [vmem:[%s802 + $0xcc] sm:$0xf]
        %v855 = vld [vmem:[%s802 + $0xd0] sm:$0xf]
        %v856 = vld [vmem:[%s802 + $0xd4] sm:$0xf]
        %v857 = vld [vmem:[%s802 + $0xd8] sm:$0xf]
        %v858 = vld [vmem:[%s802 + $0xdc] sm:$0xf]
        %v859 = vld [vmem:[%s802 + $0xe0] sm:$0xf]
        %v860 = vld [vmem:[%s802 + $0xe4] sm:$0xf]
        %v861 = vld [vmem:[%s802 + $0xe8] sm:$0xf]
        %v862 = vld [vmem:[%s802 + $0xec] sm:$0xf]
        %v863 = vld [vmem:[%s802 + $0xf0] sm:$0xf]
        %v864 = vld [vmem:[%s802 + $0xf4] sm:$0xf]
        %v865 = vld [vmem:[%s802 + $0xf8] sm:$0xf]
        %v866 = vld [vmem:[%s802 + $0xfc] sm:$0xf]
        %v867 = vld [vmem:[#allocation2] sm:$0xff]
        %v868 = vld [vmem:[#allocation2 + $0x8] sm:$0xff]
        %v869 = vld [vmem:[#allocation2 + $0x10] sm:$0xff]
        %v870 = vld [vmem:[#allocation2 + $0x18] sm:$0xff]
        %v871 = vld [vmem:[#allocation2 + $0x20] sm:$0xff]
        %v872 = vld [vmem:[#allocation2 + $0x28] sm:$0xff]
        %v873 = vld [vmem:[#allocation2 + $0x30] sm:$0xff]
        %v874 = vld [vmem:[#allocation2 + $0x38] sm:$0xff]
        %v875 = vld [vmem:[#allocation2 + $0x40] sm:$0xff]
        %v876 = vld [vmem:[#allocation2 + $0x48] sm:$0xff]
        %v877 = vld [vmem:[#allocation2 + $0x50] sm:$0xff]
        %v878 = vld [vmem:[#allocation2 + $0x58] sm:$0xff]
        %v879 = vld [vmem:[#allocation2 + $0x60] sm:$0xff]
        %v880 = vld [vmem:[#allocation2 + $0x68] sm:$0xff]
        %v881 = vld [vmem:[#allocation2 + $0x70] sm:$0xff]
        %v882 = vld [vmem:[#allocation2 + $0x78] sm:$0xff]
        %v883 = vld [vmem:[#allocation2 + $0x80] sm:$0xff]
        %v884 = vld [vmem:[#allocation2 + $0x88] sm:$0xff]
        %v885 = vld [vmem:[#allocation2 + $0x90] sm:$0xff]
        %v886 = vld [vmem:[#allocation2 + $0x98] sm:$0xff]
        %v887 = vld [vmem:[#allocation2 + $0xa0] sm:$0xff]
        %v888 = vld [vmem:[#allocation2 + $0xa8] sm:$0xff]
        %v889 = vld [vmem:[#allocation2 + $0xb0] sm:$0xff]
        %v890 = vld [vmem:[#allocation2 + $0xb8] sm:$0xff]
        %v891 = vld [vmem:[#allocation2 + $0xc0] sm:$0xff]
        %v892 = vld [vmem:[#allocation2 + $0xc8] sm:$0xff]
        %v893 = vld [vmem:[#allocation2 + $0xd0] sm:$0xff]
        %v894 = vld [vmem:[#allocation2 + $0xd8] sm:$0xff]
        %v895 = vld [vmem:[#allocation2 + $0xe0] sm:$0xff]
        %v896 = vld [vmem:[#allocation2 + $0xe8] sm:$0xff]
        %v897 = vld [vmem:[#allocation2 + $0xf0] sm:$0xff]
        %v898 = vld [vmem:[#allocation2 + $0xf8] sm:$0xff]
        %v899 = vld [vmem:[%s335] sm:$0xff]
        %v900 = vld [vmem:[%s335 + $0x8] sm:$0xff]
        %v901 = vld [vmem:[%s335 + $0x10] sm:$0xff]
        %v902 = vld [vmem:[%s335 + $0x18] sm:$0xff]
        %v903 = vld [vmem:[%s335 + $0x20] sm:$0xff]
        %v904 = vld [vmem:[%s335 + $0x28] sm:$0xff]
        %v905 = vld [vmem:[%s335 + $0x30] sm:$0xff]
        %v906 = vld [vmem:[%s335 + $0x38] sm:$0xff]
        %v907 = vld [vmem:[%s335 + $0x40] sm:$0xff]
        %v908 = vld [vmem:[%s335 + $0x48] sm:$0xff]
        %v909 = vld [vmem:[%s335 + $0x50] sm:$0xff]
        %v910 = vld [vmem:[%s335 + $0x58] sm:$0xff]
        %v911 = vld [vmem:[%s335 + $0x60] sm:$0xff]
        %v912 = vld [vmem:[%s335 + $0x68] sm:$0xff]
        %v913 = vld [vmem:[%s335 + $0x70] sm:$0xff]
        %v914 = vld [vmem:[%s335 + $0x78] sm:$0xff]
        %v915 = vld [vmem:[%s335 + $0x80] sm:$0xff]
        %v916 = vld [vmem:[%s335 + $0x88] sm:$0xff]
        %v917 = vld [vmem:[%s335 + $0x90] sm:$0xff]
        %v918 = vld [vmem:[%s335 + $0x98] sm:$0xff]
        %v919 = vld [vmem:[%s335 + $0xa0] sm:$0xff]
        %v920 = vld [vmem:[%s335 + $0xa8] sm:$0xff]
        %v921 = vld [vmem:[%s335 + $0xb0] sm:$0xff]
        %v922 = vld [vmem:[%s335 + $0xb8] sm:$0xff]
        %v923 = vld [vmem:[%s335 + $0xc0] sm:$0xff]
        %v924 = vld [vmem:[%s335 + $0xc8] sm:$0xff]
        %v925 = vld [vmem:[%s335 + $0xd0] sm:$0xff]
        %v926 = vld [vmem:[%s335 + $0xd8] sm:$0xff]
        %v927 = vld [vmem:[%s335 + $0xe0] sm:$0xff]
        %v928 = vld [vmem:[%s335 + $0xe8] sm:$0xff]
        %v929 = vld [vmem:[%s335 + $0xf0] sm:$0xff]
        %v930 = vld [vmem:[%s335 + $0xf8] sm:$0xff]
        %v931 = vld [vmem:[%s335 + $0x100] sm:$0xff]
        %v932 = vld [vmem:[%s335 + $0x108] sm:$0xff]
        %v933 = vld [vmem:[%s335 + $0x110] sm:$0xff]
        %v934 = vld [vmem:[%s335 + $0x118] sm:$0xff]
        %v935 = vld [vmem:[%s335 + $0x120] sm:$0xff]
        %v936 = vld [vmem:[%s335 + $0x128] sm:$0xff]
        %v937 = vld [vmem:[%s335 + $0x130] sm:$0xff]
        %v938 = vld [vmem:[%s335 + $0x138] sm:$0xff]
        %v939 = vld [vmem:[%s335 + $0x140] sm:$0xff]
        %v940 = vld [vmem:[%s335 + $0x148] sm:$0xff]
        %v941 = vld [vmem:[%s335 + $0x150] sm:$0xff]
        %v942 = vld [vmem:[%s335 + $0x158] sm:$0xff]
        %v943 = vld [vmem:[%s335 + $0x160] sm:$0xff]
        %v944 = vld [vmem:[%s335 + $0x168] sm:$0xff]
        %v945 = vld [vmem:[%s335 + $0x170] sm:$0xff]
        %v946 = vld [vmem:[%s335 + $0x178] sm:$0xff]
        %v947 = vld [vmem:[%s335 + $0x180] sm:$0xff]
        %v948 = vld [vmem:[%s335 + $0x188] sm:$0xff]
        %v949 = vld [vmem:[%s335 + $0x190] sm:$0xff]
        %v950 = vld [vmem:[%s335 + $0x198] sm:$0xff]
        %v951 = vld [vmem:[%s335 + $0x1a0] sm:$0xff]
        %v952 = vld [vmem:[%s335 + $0x1a8] sm:$0xff]
        %v953 = vld [vmem:[%s335 + $0x1b0] sm:$0xff]
        %v954 = vld [vmem:[%s335 + $0x1b8] sm:$0xff]
        %v955 = vld [vmem:[%s335 + $0x1c0] sm:$0xff]
        %v956 = vld [vmem:[%s335 + $0x1c8] sm:$0xff]
        %v957 = vld [vmem:[%s335 + $0x1d0] sm:$0xff]
        %v958 = vld [vmem:[%s335 + $0x1d8] sm:$0xff]
        %v959 = vld [vmem:[%s335 + $0x1e0] sm:$0xff]
        %v960 = vld [vmem:[%s335 + $0x1e8] sm:$0xff]
        %v961 = vld [vmem:[%s335 + $0x1f0] sm:$0xff]
        %v962 = vld [vmem:[%s335 + $0x1f8] sm:$0xff]
        %v1027 = vunpack.c.l.b16 %v899
        %v1028 = vunpack.c.h.b16 %v899
        %v1029 = vunpack.c.l.b16 %v900
        %v1030 = vunpack.c.h.b16 %v900
        %v1031 = vunpack.c.l.b16 %v901
        %v1032 = vunpack.c.h.b16 %v901
        %v1033 = vunpack.c.l.b16 %v902
        %v1034 = vunpack.c.h.b16 %v902
        %v1035 = vunpack.c.l.b16 %v903
        %v1036 = vunpack.c.h.b16 %v903
        %v1037 = vunpack.c.l.b16 %v904
        %v1038 = vunpack.c.h.b16 %v904
        %v1039 = vunpack.c.l.b16 %v905
        %v1040 = vunpack.c.h.b16 %v905
        %v1041 = vunpack.c.l.b16 %v906
        %v1042 = vunpack.c.h.b16 %v906
        %v1043 = vunpack.c.l.b16 %v907
        %v1044 = vunpack.c.h.b16 %v907
        %v1045 = vunpack.c.l.b16 %v908
        %v1046 = vunpack.c.h.b16 %v908
        %v1047 = vunpack.c.l.b16 %v909
        %v1048 = vunpack.c.h.b16 %v909
        %v1049 = vunpack.c.l.b16 %v910
        %v1050 = vunpack.c.h.b16 %v910
        %v1051 = vunpack.c.l.b16 %v911
        %v1052 = vunpack.c.h.b16 %v911
        %v1053 = vunpack.c.l.b16 %v912
        %v1054 = vunpack.c.h.b16 %v912
        %v1055 = vunpack.c.l.b16 %v913
        %v1056 = vunpack.c.h.b16 %v913
        %v1057 = vunpack.c.l.b16 %v914
        %v1058 = vunpack.c.h.b16 %v914
        %v1059 = vunpack.c.l.b16 %v915
        %v1060 = vunpack.c.h.b16 %v915
        %v1061 = vunpack.c.l.b16 %v916
        %v1062 = vunpack.c.h.b16 %v916
        %v1063 = vunpack.c.l.b16 %v917
        %v1064 = vunpack.c.h.b16 %v917
        %v1065 = vunpack.c.l.b16 %v918
        %v1066 = vunpack.c.h.b16 %v918
        %v1067 = vunpack.c.l.b16 %v919
        %v1068 = vunpack.c.h.b16 %v919
        %v1069 = vunpack.c.l.b16 %v920
        %v1070 = vunpack.c.h.b16 %v920
        %v1071 = vunpack.c.l.b16 %v921
        %v1072 = vunpack.c.h.b16 %v921
        %v1073 = vunpack.c.l.b16 %v922
        %v1074 = vunpack.c.h.b16 %v922
        %v1075 = vunpack.c.l.b16 %v923
        %v1076 = vunpack.c.h.b16 %v923
        %v1077 = vunpack.c.l.b16 %v924
        %v1078 = vunpack.c.h.b16 %v924
        %v1079 = vunpack.c.l.b16 %v925
        %v1080 = vunpack.c.h.b16 %v925
        %v1081 = vunpack.c.l.b16 %v926
        %v1082 = vunpack.c.h.b16 %v926
        %v1083 = vunpack.c.l.b16 %v927
        %v1084 = vunpack.c.h.b16 %v927
        %v1085 = vunpack.c.l.b16 %v928
        %v1086 = vunpack.c.h.b16 %v928
        %v1087 = vunpack.c.l.b16 %v929
        %v1088 = vunpack.c.h.b16 %v929
        %v1089 = vunpack.c.l.b16 %v930
        %v1090 = vunpack.c.h.b16 %v930
        %v1091 = vunpack.c.l.b16 %v931
        %v1092 = vunpack.c.h.b16 %v931
        %v1093 = vunpack.c.l.b16 %v932
        %v1094 = vunpack.c.h.b16 %v932
        %v1095 = vunpack.c.l.b16 %v933
        %v1096 = vunpack.c.h.b16 %v933
        %v1097 = vunpack.c.l.b16 %v934
        %v1098 = vunpack.c.h.b16 %v934
        %v1099 = vunpack.c.l.b16 %v935
        %v1100 = vunpack.c.h.b16 %v935
        %v1101 = vunpack.c.l.b16 %v936
        %v1102 = vunpack.c.h.b16 %v936
        %v1103 = vunpack.c.l.b16 %v937
        %v1104 = vunpack.c.h.b16 %v937
        %v1105 = vunpack.c.l.b16 %v938
        %v1106 = vunpack.c.h.b16 %v938
        %v1107 = vunpack.c.l.b16 %v939
        %v1108 = vunpack.c.h.b16 %v939
        %v1109 = vunpack.c.l.b16 %v940
        %v1110 = vunpack.c.h.b16 %v940
        %v1111 = vunpack.c.l.b16 %v941
        %v1112 = vunpack.c.h.b16 %v941
        %v1113 = vunpack.c.l.b16 %v942
        %v1114 = vunpack.c.h.b16 %v942
        %v1115 = vunpack.c.l.b16 %v943
        %v1116 = vunpack.c.h.b16 %v943
        %v1117 = vunpack.c.l.b16 %v944
        %v1118 = vunpack.c.h.b16 %v944
        %v1119 = vunpack.c.l.b16 %v945
        %v1120 = vunpack.c.h.b16 %v945
        %v1121 = vunpack.c.l.b16 %v946
        %v1122 = vunpack.c.h.b16 %v946
        %v1123 = vunpack.c.l.b16 %v947
        %v1124 = vunpack.c.h.b16 %v947
        %v1125 = vunpack.c.l.b16 %v948
        %v1126 = vunpack.c.h.b16 %v948
        %v1127 = vunpack.c.l.b16 %v949
        %v1128 = vunpack.c.h.b16 %v949
        %v1129 = vunpack.c.l.b16 %v950
        %v1130 = vunpack.c.h.b16 %v950
        %v1131 = vunpack.c.l.b16 %v951
        %v1132 = vunpack.c.h.b16 %v951
        %v1133 = vunpack.c.l.b16 %v952
        %v1134 = vunpack.c.h.b16 %v952
        %v1135 = vunpack.c.l.b16 %v953
        %v1136 = vunpack.c.h.b16 %v953
        %v1137 = vunpack.c.l.b16 %v954
        %v1138 = vunpack.c.h.b16 %v954
        %v1139 = vunpack.c.l.b16 %v955
        %v1140 = vunpack.c.h.b16 %v955
        %v1141 = vunpack.c.l.b16 %v956
        %v1142 = vunpack.c.h.b16 %v956
        %v1143 = vunpack.c.l.b16 %v957
        %v1144 = vunpack.c.h.b16 %v957
        %v1145 = vunpack.c.l.b16 %v958
        %v1146 = vunpack.c.h.b16 %v958
        %v1147 = vunpack.c.l.b16 %v959
        %v1148 = vunpack.c.h.b16 %v959
        %v1149 = vunpack.c.l.b16 %v960
        %v1150 = vunpack.c.h.b16 %v960
        %v1151 = vunpack.c.l.b16 %v961
        %v1152 = vunpack.c.h.b16 %v961
        %v1153 = vunpack.c.l.b16 %v962
        %v1154 = vunpack.c.h.b16 %v962
        %v1155 = vpack.c.b16 %v1031, %v1027
        %v1156 = vpack.c.b16 %v1032, %v1028
        %v1157 = vpack.c.b16 %v1033, %v1029
        %v1158 = vpack.c.b16 %v1034, %v1030
        %v1159 = vpack.c.b16 %v1039, %v1035
        %v1160 = vpack.c.b16 %v1040, %v1036
        %v1161 = vpack.c.b16 %v1041, %v1037
        %v1162 = vpack.c.b16 %v1042, %v1038
        %v1163 = vpack.c.b16 %v1047, %v1043
        %v1164 = vpack.c.b16 %v1048, %v1044
        %v1165 = vpack.c.b16 %v1049, %v1045
        %v1166 = vpack.c.b16 %v1050, %v1046
        %v1167 = vpack.c.b16 %v1055, %v1051
        %v1168 = vpack.c.b16 %v1056, %v1052
        %v1169 = vpack.c.b16 %v1057, %v1053
        %v1170 = vpack.c.b16 %v1058, %v1054
        %v1171 = vpack.c.b16 %v1063, %v1059
        %v1172 = vpack.c.b16 %v1064, %v1060
        %v1173 = vpack.c.b16 %v1065, %v1061
        %v1174 = vpack.c.b16 %v1066, %v1062
        %v1175 = vpack.c.b16 %v1071, %v1067
        %v1176 = vpack.c.b16 %v1072, %v1068
        %v1177 = vpack.c.b16 %v1073, %v1069
        %v1178 = vpack.c.b16 %v1074, %v1070
        %v1179 = vpack.c.b16 %v1079, %v1075
        %v1180 = vpack.c.b16 %v1080, %v1076
        %v1181 = vpack.c.b16 %v1081, %v1077
        %v1182 = vpack.c.b16 %v1082, %v1078
        %v1183 = vpack.c.b16 %v1087, %v1083
        %v1184 = vpack.c.b16 %v1088, %v1084
        %v1185 = vpack.c.b16 %v1089, %v1085
        %v1186 = vpack.c.b16 %v1090, %v1086
        %v1187 = vpack.c.b16 %v1095, %v1091
        %v1188 = vpack.c.b16 %v1096, %v1092
        %v1189 = vpack.c.b16 %v1097, %v1093
        %v1190 = vpack.c.b16 %v1098, %v1094
        %v1191 = vpack.c.b16 %v1103, %v1099
        %v1192 = vpack.c.b16 %v1104, %v1100
        %v1193 = vpack.c.b16 %v1105, %v1101
        %v1194 = vpack.c.b16 %v1106, %v1102
        %v1195 = vpack.c.b16 %v1111, %v1107
        %v1196 = vpack.c.b16 %v1112, %v1108
        %v1197 = vpack.c.b16 %v1113, %v1109
        %v1198 = vpack.c.b16 %v1114, %v1110
        %v1199 = vpack.c.b16 %v1119, %v1115
        %v1200 = vpack.c.b16 %v1120, %v1116
        %v1201 = vpack.c.b16 %v1121, %v1117
        %v1202 = vpack.c.b16 %v1122, %v1118
        %v1203 = vpack.c.b16 %v1127, %v1123
        %v1204 = vpack.c.b16 %v1128, %v1124
        %v1205 = vpack.c.b16 %v1129, %v1125
        %v1206 = vpack.c.b16 %v1130, %v1126
        %v1207 = vpack.c.b16 %v1135, %v1131
        %v1208 = vpack.c.b16 %v1136, %v1132
        %v1209 = vpack.c.b16 %v1137, %v1133
        %v1210 = vpack.c.b16 %v1138, %v1134
        %v1211 = vpack.c.b16 %v1143, %v1139
        %v1212 = vpack.c.b16 %v1144, %v1140
        %v1213 = vpack.c.b16 %v1145, %v1141
        %v1214 = vpack.c.b16 %v1146, %v1142
        %v1215 = vpack.c.b16 %v1151, %v1147
        %v1216 = vpack.c.b16 %v1152, %v1148
        %v1217 = vpack.c.b16 %v1153, %v1149
        %v1218 = vpack.c.b16 %v1154, %v1150
        %v1347 = vunpack.c.l.b16 %v803
        %v1348 = vunpack.c.l.b16 %v804
        %v1349 = vunpack.c.l.b16 %v805
        %v1350 = vunpack.c.l.b16 %v806
        %v1351 = vunpack.c.l.b16 %v807
        %v1352 = vunpack.c.l.b16 %v808
        %v1353 = vunpack.c.l.b16 %v809
        %v1354 = vunpack.c.l.b16 %v810
        %v1355 = vunpack.c.l.b16 %v811
        %v1356 = vunpack.c.l.b16 %v812
        %v1357 = vunpack.c.l.b16 %v813
        %v1358 = vunpack.c.l.b16 %v814
        %v1359 = vunpack.c.l.b16 %v815
        %v1360 = vunpack.c.l.b16 %v816
        %v1361 = vunpack.c.l.b16 %v817
        %v1362 = vunpack.c.l.b16 %v818
        %v1363 = vunpack.c.l.b16 %v819
        %v1364 = vunpack.c.l.b16 %v820
        %v1365 = vunpack.c.l.b16 %v821
        %v1366 = vunpack.c.l.b16 %v822
        %v1367 = vunpack.c.l.b16 %v823
        %v1368 = vunpack.c.l.b16 %v824
        %v1369 = vunpack.c.l.b16 %v825
        %v1370 = vunpack.c.l.b16 %v826
        %v1371 = vunpack.c.l.b16 %v827
        %v1372 = vunpack.c.l.b16 %v828
        %v1373 = vunpack.c.l.b16 %v829
        %v1374 = vunpack.c.l.b16 %v830
        %v1375 = vunpack.c.l.b16 %v831
        %v1376 = vunpack.c.l.b16 %v832
        %v1377 = vunpack.c.l.b16 %v833
        %v1378 = vunpack.c.l.b16 %v834
        %v1379 = vunpack.c.l.b16 %v835
        %v1380 = vunpack.c.l.b16 %v836
        %v1381 = vunpack.c.l.b16 %v837
        %v1382 = vunpack.c.l.b16 %v838
        %v1383 = vunpack.c.l.b16 %v839
        %v1384 = vunpack.c.l.b16 %v840
        %v1385 = vunpack.c.l.b16 %v841
        %v1386 = vunpack.c.l.b16 %v842
        %v1387 = vunpack.c.l.b16 %v843
        %v1388 = vunpack.c.l.b16 %v844
        %v1389 = vunpack.c.l.b16 %v845
        %v1390 = vunpack.c.l.b16 %v846
        %v1391 = vunpack.c.l.b16 %v847
        %v1392 = vunpack.c.l.b16 %v848
        %v1393 = vunpack.c.l.b16 %v849
        %v1394 = vunpack.c.l.b16 %v850
        %v1395 = vunpack.c.l.b16 %v851
        %v1396 = vunpack.c.l.b16 %v852
        %v1397 = vunpack.c.l.b16 %v853
        %v1398 = vunpack.c.l.b16 %v854
        %v1399 = vunpack.c.l.b16 %v855
        %v1400 = vunpack.c.l.b16 %v856
        %v1401 = vunpack.c.l.b16 %v857
        %v1402 = vunpack.c.l.b16 %v858
        %v1403 = vunpack.c.l.b16 %v859
        %v1404 = vunpack.c.l.b16 %v860
        %v1405 = vunpack.c.l.b16 %v861
        %v1406 = vunpack.c.l.b16 %v862
        %v1407 = vunpack.c.l.b16 %v863
        %v1408 = vunpack.c.l.b16 %v864
        %v1409 = vunpack.c.l.b16 %v865
        %v1410 = vunpack.c.l.b16 %v866
        %v1411 = vpack.c.b16 %v1348, %v1347
        %v1412 = vpack.c.b16 %v1350, %v1349
        %v1413 = vpack.c.b16 %v1352, %v1351
        %v1414 = vpack.c.b16 %v1354, %v1353
        %v1415 = vpack.c.b16 %v1356, %v1355
        %v1416 = vpack.c.b16 %v1358, %v1357
        %v1417 = vpack.c.b16 %v1360, %v1359
        %v1418 = vpack.c.b16 %v1362, %v1361
        %v1419 = vpack.c.b16 %v1364, %v1363
        %v1420 = vpack.c.b16 %v1366, %v1365
        %v1421 = vpack.c.b16 %v1368, %v1367
        %v1422 = vpack.c.b16 %v1370, %v1369
        %v1423 = vpack.c.b16 %v1372, %v1371
        %v1424 = vpack.c.b16 %v1374, %v1373
        %v1425 = vpack.c.b16 %v1376, %v1375
        %v1426 = vpack.c.b16 %v1378, %v1377
        %v1427 = vpack.c.b16 %v1380, %v1379
        %v1428 = vpack.c.b16 %v1382, %v1381
        %v1429 = vpack.c.b16 %v1384, %v1383
        %v1430 = vpack.c.b16 %v1386, %v1385
        %v1431 = vpack.c.b16 %v1388, %v1387
        %v1432 = vpack.c.b16 %v1390, %v1389
        %v1433 = vpack.c.b16 %v1392, %v1391
        %v1434 = vpack.c.b16 %v1394, %v1393
        %v1435 = vpack.c.b16 %v1396, %v1395
        %v1436 = vpack.c.b16 %v1398, %v1397
        %v1437 = vpack.c.b16 %v1400, %v1399
        %v1438 = vpack.c.b16 %v1402, %v1401
        %v1439 = vpack.c.b16 %v1404, %v1403
        %v1440 = vpack.c.b16 %v1406, %v1405
        %v1441 = vpack.c.b16 %v1408, %v1407
        %v1442 = vpack.c.b16 %v1410, %v1409
        %1475 = vmatprep.subr.bf16.mxu0 0
        %1476 = vmatpush1.bf16.msra.mxu0 %v1411
        %1477 = vmatprep.subr.bf16.mxu0 0
        %1478 = vmatpush1.bf16.msra.mxu0 %v1412
        %1479 = vmatprep.subr.bf16.mxu0 0
        %1480 = vmatpush1.bf16.msra.mxu0 %v1413
        %1481 = vmatprep.subr.bf16.mxu0 0
        %1482 = vmatpush1.bf16.msra.mxu0 %v1414
        %1483 = vmatprep.subr.bf16.mxu0 0
        %1484 = vmatpush1.bf16.msra.mxu0 %v1415
        %1485 = vmatprep.subr.bf16.mxu0 0
        %1486 = vmatpush1.bf16.msra.mxu0 %v1416
        %1487 = vmatprep.subr.bf16.mxu0 0
        %1488 = vmatpush1.bf16.msra.mxu0 %v1417
        %1489 = vmatprep.subr.bf16.mxu0 0
        %1490 = vmatpush1.bf16.msra.mxu0 %v1418
        %1491 = vmatprep.subr.bf16.mxu0 0
        %1492 = vmatpush1.bf16.msra.mxu0 %v1419
        %1493 = vmatprep.subr.bf16.mxu0 0
        %1494 = vmatpush1.bf16.msra.mxu0 %v1420
        %1495 = vmatprep.subr.bf16.mxu0 0
        %1496 = vmatpush1.bf16.msra.mxu0 %v1421
        %1497 = vmatprep.subr.bf16.mxu0 0
        %1498 = vmatpush1.bf16.msra.mxu0 %v1422
        %1499 = vmatprep.subr.bf16.mxu0 0
        %1500 = vmatpush1.bf16.msra.mxu0 %v1423
        %1501 = vmatprep.subr.bf16.mxu0 0
        %1502 = vmatpush1.bf16.msra.mxu0 %v1424
        %1503 = vmatprep.subr.bf16.mxu0 0
        %1504 = vmatpush1.bf16.msra.mxu0 %v1425
        %1505 = vmatprep.subr.bf16.mxu0 0
        %1506 = vmatpush1.bf16.msra.mxu0 %v1426
        %1507 = vmatprep.mubr.bf16.mxu0 %v1156
        %1508 = vmatmul.mubr.bf16.gmra.mrb[0].mxu0 %v1155
        %v1509 = vpop.f32.mrb[0].mxu0
        %v1510 = vadd.f32 0.0, %v1509
        %v1511 = vpop.f32.mrb[0].mxu0
        %v1512 = vpop.f32.mrb[0].mxu0
        %v1513 = vadd.f32 0.0, %v1512
        %v1514 = vpop.f32.mrb[0].mxu0
        %1515 = vmatprep.mubr.bf16.mxu0 %v1160
        %1516 = vmatmul.mubr.bf16.gmra.mrb[0].mxu0 %v1159
        %v1517 = vpop.f32.mrb[0].mxu0
        %v1518 = vadd.f32 0.0, %v1517
        %v1519 = vpop.f32.mrb[0].mxu0
        %v1520 = vpop.f32.mrb[0].mxu0
        %v1521 = vadd.f32 0.0, %v1520
        %v1522 = vpop.f32.mrb[0].mxu0
        %1523 = vmatprep.mubr.bf16.mxu0 %v1164
        %1524 = vmatmul.mubr.bf16.gmra.mrb[0].mxu0 %v1163
        %v1525 = vpop.f32.mrb[0].mxu0
        %v1526 = vadd.f32 0.0, %v1525
        %v1527 = vpop.f32.mrb[0].mxu0
        %v1528 = vpop.f32.mrb[0].mxu0
        %v1529 = vadd.f32 0.0, %v1528
        %v1530 = vpop.f32.mrb[0].mxu0
        %1531 = vmatprep.mubr.bf16.mxu0 %v1168
        %1532 = vmatmul.mubr.bf16.gmra.mrb[0].mxu0 %v1167
        %v1533 = vpop.f32.mrb[0].mxu0
        %v1534 = vadd.f32 0.0, %v1533
        %v1535 = vpop.f32.mrb[0].mxu0
        %v1536 = vpop.f32.mrb[0].mxu0
        %v1537 = vadd.f32 0.0, %v1536
        %v1538 = vpop.f32.mrb[0].mxu0
        %1539 = vmatprep.mubr.bf16.mxu0 %v1172
        %1540 = vmatmul.mubr.bf16.gmra.mrb[0].mxu0 %v1171
        %v1541 = vpop.f32.mrb[0].mxu0
        %v1542 = vadd.f32 0.0, %v1541
        %v1543 = vpop.f32.mrb[0].mxu0
        %v1544 = vpop.f32.mrb[0].mxu0
        %v1545 = vadd.f32 0.0, %v1544
        %v1546 = vpop.f32.mrb[0].mxu0
        %1547 = vmatprep.mubr.bf16.mxu0 %v1176
        %1548 = vmatmul.mubr.bf16.gmra.mrb[0].mxu0 %v1175
        %v1549 = vpop.f32.mrb[0].mxu0
        %v1550 = vadd.f32 0.0, %v1549
        %v1551 = vpop.f32.mrb[0].mxu0
        %v1552 = vpop.f32.mrb[0].mxu0
        %v1553 = vadd.f32 0.0, %v1552
        %v1554 = vpop.f32.mrb[0].mxu0
        %1555 = vmatprep.mubr.bf16.mxu0 %v1180
        %1556 = vmatmul.mubr.bf16.gmra.mrb[0].mxu0 %v1179
        %v1557 = vpop.f32.mrb[0].mxu0
        %v1558 = vadd.f32 0.0, %v1557
        %v1559 = vpop.f32.mrb[0].mxu0
        %v1560 = vpop.f32.mrb[0].mxu0
        %v1561 = vadd.f32 0.0, %v1560
        %v1562 = vpop.f32.mrb[0].mxu0
        %1563 = vmatprep.mubr.bf16.mxu0 %v1184
        %1564 = vmatmul.mubr.bf16.gmra.mrb[0].mxu0 %v1183
        %v1565 = vpop.f32.mrb[0].mxu0
        %v1566 = vadd.f32 0.0, %v1565
        %v1567 = vpop.f32.mrb[0].mxu0
        %v1568 = vpop.f32.mrb[0].mxu0
        %v1569 = vadd.f32 0.0, %v1568
        %v1570 = vpop.f32.mrb[0].mxu0
        %1571 = vmatprep.mubr.bf16.mxu0 %v1188
        %1572 = vmatmul.mubr.bf16.gmra.mrb[0].mxu0 %v1187
        %v1573 = vpop.f32.mrb[0].mxu0
        %v1574 = vadd.f32 0.0, %v1573
        %v1575 = vpop.f32.mrb[0].mxu0
        %v1576 = vpop.f32.mrb[0].mxu0
        %v1577 = vadd.f32 0.0, %v1576
        %v1578 = vpop.f32.mrb[0].mxu0
        %1579 = vmatprep.mubr.bf16.mxu0 %v1192
        %1580 = vmatmul.mubr.bf16.gmra.mrb[0].mxu0 %v1191
        %v1581 = vpop.f32.mrb[0].mxu0
        %v1582 = vadd.f32 0.0, %v1581
        %v1583 = vpop.f32.mrb[0].mxu0
        %v1584 = vpop.f32.mrb[0].mxu0
        %v1585 = vadd.f32 0.0, %v1584
        %v1586 = vpop.f32.mrb[0].mxu0
        %1587 = vmatprep.mubr.bf16.mxu0 %v1196
        %1588 = vmatmul.mubr.bf16.gmra.mrb[0].mxu0 %v1195
        %v1589 = vpop.f32.mrb[0].mxu0
        %v1590 = vadd.f32 0.0, %v1589
        %v1591 = vpop.f32.mrb[0].mxu0
        %v1592 = vpop.f32.mrb[0].mxu0
        %v1593 = vadd.f32 0.0, %v1592
        %v1594 = vpop.f32.mrb[0].mxu0
        %1595 = vmatprep.mubr.bf16.mxu0 %v1200
        %1596 = vmatmul.mubr.bf16.gmra.mrb[0].mxu0 %v1199
        %v1597 = vpop.f32.mrb[0].mxu0
        %v1598 = vadd.f32 0.0, %v1597
        %v1599 = vpop.f32.mrb[0].mxu0
        %v1600 = vpop.f32.mrb[0].mxu0
        %v1601 = vadd.f32 0.0, %v1600
        %v1602 = vpop.f32.mrb[0].mxu0
        %1603 = vmatprep.mubr.bf16.mxu0 %v1204
        %1604 = vmatmul.mubr.bf16.gmra.mrb[0].mxu0 %v1203
        %v1605 = vpop.f32.mrb[0].mxu0
        %v1606 = vadd.f32 0.0, %v1605
        %v1607 = vpop.f32.mrb[0].mxu0
        %v1608 = vpop.f32.mrb[0].mxu0
        %v1609 = vadd.f32 0.0, %v1608
        %v1610 = vpop.f32.mrb[0].mxu0
        %1611 = vmatprep.mubr.bf16.mxu0 %v1208
        %1612 = vmatmul.mubr.bf16.gmra.mrb[0].mxu0 %v1207
        %v1613 = vpop.f32.mrb[0].mxu0
        %v1614 = vadd.f32 0.0, %v1613
        %v1615 = vpop.f32.mrb[0].mxu0
        %v1616 = vpop.f32.mrb[0].mxu0
        %v1617 = vadd.f32 0.0, %v1616
        %v1618 = vpop.f32.mrb[0].mxu0
        %1619 = vmatprep.mubr.bf16.mxu0 %v1212
        %1620 = vmatmul.mubr.bf16.gmra.mrb[0].mxu0 %v1211
        %v1621 = vpop.f32.mrb[0].mxu0
        %v1622 = vadd.f32 0.0, %v1621
        %v1623 = vpop.f32.mrb[0].mxu0
        %v1624 = vpop.f32.mrb[0].mxu0
        %v1625 = vadd.f32 0.0, %v1624
        %v1626 = vpop.f32.mrb[0].mxu0
        %1627 = vmatprep.mubr.bf16.mxu0 %v1216
        %1628 = vmatmul.mubr.bf16.gmra.mrb[0].mxu0 %v1215
        %v1629 = vpop.f32.mrb[0].mxu0
        %v1630 = vadd.f32 0.0, %v1629
        %v1631 = vpop.f32.mrb[0].mxu0
        %v1632 = vpop.f32.mrb[0].mxu0
        %v1633 = vadd.f32 0.0, %v1632
        %v1634 = vpop.f32.mrb[0].mxu0
        %1635 = vdwg.mxu0
        %1636 = vmatprep.subr.bf16.mxu0 0
        %1637 = vmatpush1.bf16.msra.mxu0 %v1427
        %1638 = vmatprep.subr.bf16.mxu0 0
        %1639 = vmatpush1.bf16.msra.mxu0 %v1428
        %1640 = vmatprep.subr.bf16.mxu0 0
        %1641 = vmatpush1.bf16.msra.mxu0 %v1429
        %1642 = vmatprep.subr.bf16.mxu0 0
        %1643 = vmatpush1.bf16.msra.mxu0 %v1430
        %1644 = vmatprep.subr.bf16.mxu0 0
        %1645 = vmatpush1.bf16.msra.mxu0 %v1431
        %1646 = vmatprep.subr.bf16.mxu0 0
        %1647 = vmatpush1.bf16.msra.mxu0 %v1432
        %1648 = vmatprep.subr.bf16.mxu0 0
        %1649 = vmatpush1.bf16.msra.mxu0 %v1433
        %1650 = vmatprep.subr.bf16.mxu0 0
        %1651 = vmatpush1.bf16.msra.mxu0 %v1434
        %1652 = vmatprep.subr.bf16.mxu0 0
        %1653 = vmatpush1.bf16.msra.mxu0 %v1435
        %1654 = vmatprep.subr.bf16.mxu0 0
        %1655 = vmatpush1.bf16.msra.mxu0 %v1436
        %1656 = vmatprep.subr.bf16.mxu0 0
        %1657 = vmatpush1.bf16.msra.mxu0 %v1437
        %1658 = vmatprep.subr.bf16.mxu0 0
        %1659 = vmatpush1.bf16.msra.mxu0 %v1438
        %1660 = vmatprep.subr.bf16.mxu0 0
        %1661 = vmatpush1.bf16.msra.mxu0 %v1439
        %1662 = vmatprep.subr.bf16.mxu0 0
        %1663 = vmatpush1.bf16.msra.mxu0 %v1440
        %1664 = vmatprep.subr.bf16.mxu0 0
        %1665 = vmatpush1.bf16.msra.mxu0 %v1441
        %1666 = vmatprep.subr.bf16.mxu0 0
        %1667 = vmatpush1.bf16.msra.mxu0 %v1442
        %1668 = vmatprep.mubr.bf16.mxu0 %v1158
        %1669 = vmatmul.mubr.bf16.gmra.mrb[0].mxu0 %v1157
        %v1670 = vpop.f32.mrb[0].mxu0
        %v1671 = vadd.f32 %v1510, %v1670
        %v1672 = vpop.f32.mrb[0].mxu0
        %v1673 = vpop.f32.mrb[0].mxu0
        %v1674 = vadd.f32 %v1513, %v1673
        %v1675 = vpop.f32.mrb[0].mxu0
        %1676 = vmatprep.mubr.bf16.mxu0 %v1162
        %1677 = vmatmul.mubr.bf16.gmra.mrb[0].mxu0 %v1161
        %v1678 = vpop.f32.mrb[0].mxu0
        %v1679 = vadd.f32 %v1518, %v1678
        %v1680 = vpop.f32.mrb[0].mxu0
        %v1681 = vpop.f32.mrb[0].mxu0
        %v1682 = vadd.f32 %v1521, %v1681
        %v1683 = vpop.f32.mrb[0].mxu0
        %1684 = vmatprep.mubr.bf16.mxu0 %v1166
        %1685 = vmatmul.mubr.bf16.gmra.mrb[0].mxu0 %v1165
        %v1686 = vpop.f32.mrb[0].mxu0
        %v1687 = vadd.f32 %v1526, %v1686
        %v1688 = vpop.f32.mrb[0].mxu0
        %v1689 = vpop.f32.mrb[0].mxu0
        %v1690 = vadd.f32 %v1529, %v1689
        %v1691 = vpop.f32.mrb[0].mxu0
        %1692 = vmatprep.mubr.bf16.mxu0 %v1170
        %1693 = vmatmul.mubr.bf16.gmra.mrb[0].mxu0 %v1169
        %v1694 = vpop.f32.mrb[0].mxu0
        %v1695 = vadd.f32 %v1534, %v1694
        %v1696 = vpop.f32.mrb[0].mxu0
        %v1697 = vpop.f32.mrb[0].mxu0
        %v1698 = vadd.f32 %v1537, %v1697
        %v1699 = vpop.f32.mrb[0].mxu0
        %1700 = vmatprep.mubr.bf16.mxu0 %v1174
        %1701 = vmatmul.mubr.bf16.gmra.mrb[0].mxu0 %v1173
        %v1702 = vpop.f32.mrb[0].mxu0
        %v1703 = vadd.f32 %v1542, %v1702
        %v1704 = vpop.f32.mrb[0].mxu0
        %v1705 = vpop.f32.mrb[0].mxu0
        %v1706 = vadd.f32 %v1545, %v1705
        %v1707 = vpop.f32.mrb[0].mxu0
        %1708 = vmatprep.mubr.bf16.mxu0 %v1178
        %1709 = vmatmul.mubr.bf16.gmra.mrb[0].mxu0 %v1177
        %v1710 = vpop.f32.mrb[0].mxu0
        %v1711 = vadd.f32 %v1550, %v1710
        %v1712 = vpop.f32.mrb[0].mxu0
        %v1713 = vpop.f32.mrb[0].mxu0
        %v1714 = vadd.f32 %v1553, %v1713
        %v1715 = vpop.f32.mrb[0].mxu0
        %1716 = vmatprep.mubr.bf16.mxu0 %v1182
        %1717 = vmatmul.mubr.bf16.gmra.mrb[0].mxu0 %v1181
        %v1718 = vpop.f32.mrb[0].mxu0
        %v1719 = vadd.f32 %v1558, %v1718
        %v1720 = vpop.f32.mrb[0].mxu0
        %v1721 = vpop.f32.mrb[0].mxu0
        %v1722 = vadd.f32 %v1561, %v1721
        %v1723 = vpop.f32.mrb[0].mxu0
        %1724 = vmatprep.mubr.bf16.mxu0 %v1186
        %1725 = vmatmul.mubr.bf16.gmra.mrb[0].mxu0 %v1185
        %v1726 = vpop.f32.mrb[0].mxu0
        %v1727 = vadd.f32 %v1566, %v1726
        %v1728 = vpop.f32.mrb[0].mxu0
        %v1729 = vpop.f32.mrb[0].mxu0
        %v1730 = vadd.f32 %v1569, %v1729
        %v1731 = vpop.f32.mrb[0].mxu0
        %1732 = vmatprep.mubr.bf16.mxu0 %v1190
        %1733 = vmatmul.mubr.bf16.gmra.mrb[0].mxu0 %v1189
        %v1734 = vpop.f32.mrb[0].mxu0
        %v1735 = vadd.f32 %v1574, %v1734
        %v1736 = vpop.f32.mrb[0].mxu0
        %v1737 = vpop.f32.mrb[0].mxu0
        %v1738 = vadd.f32 %v1577, %v1737
        %v1739 = vpop.f32.mrb[0].mxu0
        %1740 = vmatprep.mubr.bf16.mxu0 %v1194
        %1741 = vmatmul.mubr.bf16.gmra.mrb[0].mxu0 %v1193
        %v1742 = vpop.f32.mrb[0].mxu0
        %v1743 = vadd.f32 %v1582, %v1742
        %v1744 = vpop.f32.mrb[0].mxu0
        %v1745 = vpop.f32.mrb[0].mxu0
        %v1746 = vadd.f32 %v1585, %v1745
        %v1747 = vpop.f32.mrb[0].mxu0
        %1748 = vmatprep.mubr.bf16.mxu0 %v1198
        %1749 = vmatmul.mubr.bf16.gmra.mrb[0].mxu0 %v1197
        %v1750 = vpop.f32.mrb[0].mxu0
        %v1751 = vadd.f32 %v1590, %v1750
        %v1752 = vpop.f32.mrb[0].mxu0
        %v1753 = vpop.f32.mrb[0].mxu0
        %v1754 = vadd.f32 %v1593, %v1753
        %v1755 = vpop.f32.mrb[0].mxu0
        %1756 = vmatprep.mubr.bf16.mxu0 %v1202
        %1757 = vmatmul.mubr.bf16.gmra.mrb[0].mxu0 %v1201
        %v1758 = vpop.f32.mrb[0].mxu0
        %v1759 = vadd.f32 %v1598, %v1758
        %v1760 = vpop.f32.mrb[0].mxu0
        %v1761 = vpop.f32.mrb[0].mxu0
        %v1762 = vadd.f32 %v1601, %v1761
        %v1763 = vpop.f32.mrb[0].mxu0
        %1764 = vmatprep.mubr.bf16.mxu0 %v1206
        %1765 = vmatmul.mubr.bf16.gmra.mrb[0].mxu0 %v1205
        %v1766 = vpop.f32.mrb[0].mxu0
        %v1767 = vadd.f32 %v1606, %v1766
        %v1768 = vpop.f32.mrb[0].mxu0
        %v1769 = vpop.f32.mrb[0].mxu0
        %v1770 = vadd.f32 %v1609, %v1769
        %v1771 = vpop.f32.mrb[0].mxu0
        %1772 = vmatprep.mubr.bf16.mxu0 %v1210
        %1773 = vmatmul.mubr.bf16.gmra.mrb[0].mxu0 %v1209
        %v1774 = vpop.f32.mrb[0].mxu0
        %v1775 = vadd.f32 %v1614, %v1774
        %v1776 = vpop.f32.mrb[0].mxu0
        %v1777 = vpop.f32.mrb[0].mxu0
        %v1778 = vadd.f32 %v1617, %v1777
        %v1779 = vpop.f32.mrb[0].mxu0
        %1780 = vmatprep.mubr.bf16.mxu0 %v1214
        %1781 = vmatmul.mubr.bf16.gmra.mrb[0].mxu0 %v1213
        %v1782 = vpop.f32.mrb[0].mxu0
        %v1783 = vadd.f32 %v1622, %v1782
        %v1784 = vpop.f32.mrb[0].mxu0
        %v1785 = vpop.f32.mrb[0].mxu0
        %v1786 = vadd.f32 %v1625, %v1785
        %v1787 = vpop.f32.mrb[0].mxu0
        %1788 = vmatprep.mubr.bf16.mxu0 %v1218
        %1789 = vmatmul.mubr.bf16.gmra.mrb[0].mxu0 %v1217
        %v1790 = vpop.f32.mrb[0].mxu0
        %v1791 = vadd.f32 %v1630, %v1790
        %v1792 = vpop.f32.mrb[0].mxu0
        %v1793 = vpop.f32.mrb[0].mxu0
        %v1794 = vadd.f32 %v1633, %v1793
        %v1795 = vpop.f32.mrb[0].mxu0
        %1796 = vdwg.mxu0
        %v1797 = vadd.f32 %v867, %v1671
        %v1798 = vadd.f32 %v868, %v1674
        %v1799 = vadd.f32 %v869, %v1679
        %v1800 = vadd.f32 %v870, %v1682
        %v1801 = vadd.f32 %v871, %v1687
        %v1802 = vadd.f32 %v872, %v1690
        %v1803 = vadd.f32 %v873, %v1695
        %v1804 = vadd.f32 %v874, %v1698
        %v1805 = vadd.f32 %v875, %v1703
        %v1806 = vadd.f32 %v876, %v1706
        %v1807 = vadd.f32 %v877, %v1711
        %v1808 = vadd.f32 %v878, %v1714
        %v1809 = vadd.f32 %v879, %v1719
        %v1810 = vadd.f32 %v880, %v1722
        %v1811 = vadd.f32 %v881, %v1727
        %v1812 = vadd.f32 %v882, %v1730
        %v1813 = vadd.f32 %v883, %v1735
        %v1814 = vadd.f32 %v884, %v1738
        %v1815 = vadd.f32 %v885, %v1743
        %v1816 = vadd.f32 %v886, %v1746
        %v1817 = vadd.f32 %v887, %v1751
        %v1818 = vadd.f32 %v888, %v1754
        %v1819 = vadd.f32 %v889, %v1759
        %v1820 = vadd.f32 %v890, %v1762
        %v1821 = vadd.f32 %v891, %v1767
        %v1822 = vadd.f32 %v892, %v1770
        %v1823 = vadd.f32 %v893, %v1775
        %v1824 = vadd.f32 %v894, %v1778
        %v1825 = vadd.f32 %v895, %v1783
        %v1826 = vadd.f32 %v896, %v1786
        %v1827 = vadd.f32 %v897, %v1791
        %v1828 = vadd.f32 %v898, %v1794
        %1829 = vst [vmem:[#allocation2] sm:$0xff] %v1797
        %1830 = vst [vmem:[#allocation2 + $0x8] sm:$0xff] %v1798
        %1831 = vst [vmem:[#allocation2 + $0x10] sm:$0xff] %v1799
        %1832 = vst [vmem:[#allocation2 + $0x18] sm:$0xff] %v1800
        %1833 = vst [vmem:[#allocation2 + $0x20] sm:$0xff] %v1801
        %1834 = vst [vmem:[#allocation2 + $0x28] sm:$0xff] %v1802
        %1835 = vst [vmem:[#allocation2 + $0x30] sm:$0xff] %v1803
        %1836 = vst [vmem:[#allocation2 + $0x38] sm:$0xff] %v1804
        %1837 = vst [vmem:[#allocation2 + $0x40] sm:$0xff] %v1805
        %1838 = vst [vmem:[#allocation2 + $0x48] sm:$0xff] %v1806
        %1839 = vst [vmem:[#allocation2 + $0x50] sm:$0xff] %v1807
        %1840 = vst [vmem:[#allocation2 + $0x58] sm:$0xff] %v1808
        %1841 = vst [vmem:[#allocation2 + $0x60] sm:$0xff] %v1809
        %1842 = vst [vmem:[#allocation2 + $0x68] sm:$0xff] %v1810
        %1843 = vst [vmem:[#allocation2 + $0x70] sm:$0xff] %v1811
        %1844 = vst [vmem:[#allocation2 + $0x78] sm:$0xff] %v1812
        %1845 = vst [vmem:[#allocation2 + $0x80] sm:$0xff] %v1813
        %1846 = vst [vmem:[#allocation2 + $0x88] sm:$0xff] %v1814
        %1847 = vst [vmem:[#allocation2 + $0x90] sm:$0xff] %v1815
        %1848 = vst [vmem:[#allocation2 + $0x98] sm:$0xff] %v1816
        %1849 = vst [vmem:[#allocation2 + $0xa0] sm:$0xff] %v1817
        %1850 = vst [vmem:[#allocation2 + $0xa8] sm:$0xff] %v1818
        %1851 = vst [vmem:[#allocation2 + $0xb0] sm:$0xff] %v1819
        %1852 = vst [vmem:[#allocation2 + $0xb8] sm:$0xff] %v1820
        %1853 = vst [vmem:[#allocation2 + $0xc0] sm:$0xff] %v1821
        %1854 = vst [vmem:[#allocation2 + $0xc8] sm:$0xff] %v1822
        %1855 = vst [vmem:[#allocation2 + $0xd0] sm:$0xff] %v1823
        %1856 = vst [vmem:[#allocation2 + $0xd8] sm:$0xff] %v1824
        %1857 = vst [vmem:[#allocation2 + $0xe0] sm:$0xff] %v1825
        %1858 = vst [vmem:[#allocation2 + $0xe8] sm:$0xff] %v1826
        %1859 = vst [vmem:[#allocation2 + $0xf0] sm:$0xff] %v1827
        %1860 = vst [vmem:[#allocation2 + $0xf8] sm:$0xff] %v1828
        // Predicated region
        $region73: #{linkx_forward_padded.1} parent=47 // pred_check
          %p1861 = pneg %p402
        $region74: #{linkx_forward_padded.1} parent=47 // pred_check_branch
          %1863 = sbr.rel (%p1861) target = $region76
        $region75: #{linkx_forward_padded.1} parent=47 // pred_region
          %v1864 = vld [vmem:[#allocation2] sm:$0xff]
          %v1865 = vld [vmem:[#allocation2 + $0x8] sm:$0xff]
          %v1866 = vld [vmem:[#allocation2 + $0x10] sm:$0xff]
          %v1867 = vld [vmem:[#allocation2 + $0x18] sm:$0xff]
          %v1868 = vld [vmem:[#allocation2 + $0x20] sm:$0xff]
          %v1869 = vld [vmem:[#allocation2 + $0x28] sm:$0xff]
          %v1870 = vld [vmem:[#allocation2 + $0x30] sm:$0xff]
          %v1871 = vld [vmem:[#allocation2 + $0x38] sm:$0xff]
          %v1872 = vld [vmem:[#allocation2 + $0x40] sm:$0xff]
          %v1873 = vld [vmem:[#allocation2 + $0x48] sm:$0xff]
          %v1874 = vld [vmem:[#allocation2 + $0x50] sm:$0xff]
          %v1875 = vld [vmem:[#allocation2 + $0x58] sm:$0xff]
          %v1876 = vld [vmem:[#allocation2 + $0x60] sm:$0xff]
          %v1877 = vld [vmem:[#allocation2 + $0x68] sm:$0xff]
          %v1878 = vld [vmem:[#allocation2 + $0x70] sm:$0xff]
          %v1879 = vld [vmem:[#allocation2 + $0x78] sm:$0xff]
          %v1880 = vld [vmem:[#allocation2 + $0x80] sm:$0xff]
          %v1881 = vld [vmem:[#allocation2 + $0x88] sm:$0xff]
          %v1882 = vld [vmem:[#allocation2 + $0x90] sm:$0xff]
          %v1883 = vld [vmem:[#allocation2 + $0x98] sm:$0xff]
          %v1884 = vld [vmem:[#allocation2 + $0xa0] sm:$0xff]
          %v1885 = vld [vmem:[#allocation2 + $0xa8] sm:$0xff]
          %v1886 = vld [vmem:[#allocation2 + $0xb0] sm:$0xff]
          %v1887 = vld [vmem:[#allocation2 + $0xb8] sm:$0xff]
          %v1888 = vld [vmem:[#allocation2 + $0xc0] sm:$0xff]
          %v1889 = vld [vmem:[#allocation2 + $0xc8] sm:$0xff]
          %v1890 = vld [vmem:[#allocation2 + $0xd0] sm:$0xff]
          %v1891 = vld [vmem:[#allocation2 + $0xd8] sm:$0xff]
          %v1892 = vld [vmem:[#allocation2 + $0xe0] sm:$0xff]
          %v1893 = vld [vmem:[#allocation2 + $0xe8] sm:$0xff]
          %v1894 = vld [vmem:[#allocation2 + $0xf0] sm:$0xff]
          %v1895 = vld [vmem:[#allocation2 + $0xf8] sm:$0xff]
          %v1896 = vmax.f32 %v1864, 0.0
          %v1897 = vmax.f32 %v1865, 0.0
          %v1898 = vmax.f32 %v1866, 0.0
          %v1899 = vmax.f32 %v1867, 0.0
          %v1900 = vmax.f32 %v1868, 0.0
          %v1901 = vmax.f32 %v1869, 0.0
          %v1902 = vmax.f32 %v1870, 0.0
          %v1903 = vmax.f32 %v1871, 0.0
          %v1904 = vmax.f32 %v1872, 0.0
          %v1905 = vmax.f32 %v1873, 0.0
          %v1906 = vmax.f32 %v1874, 0.0
          %v1907 = vmax.f32 %v1875, 0.0
          %v1908 = vmax.f32 %v1876, 0.0
          %v1909 = vmax.f32 %v1877, 0.0
          %v1910 = vmax.f32 %v1878, 0.0
          %v1911 = vmax.f32 %v1879, 0.0
          %v1912 = vmax.f32 %v1880, 0.0
          %v1913 = vmax.f32 %v1881, 0.0
          %v1914 = vmax.f32 %v1882, 0.0
          %v1915 = vmax.f32 %v1883, 0.0
          %v1916 = vmax.f32 %v1884, 0.0
          %v1917 = vmax.f32 %v1885, 0.0
          %v1918 = vmax.f32 %v1886, 0.0
          %v1919 = vmax.f32 %v1887, 0.0
          %v1920 = vmax.f32 %v1888, 0.0
          %v1921 = vmax.f32 %v1889, 0.0
          %v1922 = vmax.f32 %v1890, 0.0
          %v1923 = vmax.f32 %v1891, 0.0
          %v1924 = vmax.f32 %v1892, 0.0
          %v1925 = vmax.f32 %v1893, 0.0
          %v1926 = vmax.f32 %v1894, 0.0
          %v1927 = vmax.f32 %v1895, 0.0
          %v1928 = vpack.c.bf16 %v1897, %v1896
          %v1929 = vpack.c.bf16 %v1899, %v1898
          %v1930 = vpack.c.bf16 %v1901, %v1900
          %v1931 = vpack.c.bf16 %v1903, %v1902
          %v1932 = vpack.c.bf16 %v1905, %v1904
          %v1933 = vpack.c.bf16 %v1907, %v1906
          %v1934 = vpack.c.bf16 %v1909, %v1908
          %v1935 = vpack.c.bf16 %v1911, %v1910
          %v1936 = vpack.c.bf16 %v1913, %v1912
          %v1937 = vpack.c.bf16 %v1915, %v1914
          %v1938 = vpack.c.bf16 %v1917, %v1916
          %v1939 = vpack.c.bf16 %v1919, %v1918
          %v1940 = vpack.c.bf16 %v1921, %v1920
          %v1941 = vpack.c.bf16 %v1923, %v1922
          %v1942 = vpack.c.bf16 %v1925, %v1924
          %v1943 = vpack.c.bf16 %v1927, %v1926
          %v1944 = vld [vmem:[#allocation9] sm:$0xf]
          %v1945 = vld [vmem:[#allocation9 + $0x4] sm:$0xf]
          %v1946 = vld [vmem:[#allocation9 + $0x8] sm:$0xf]
          %v1947 = vld [vmem:[#allocation9 + $0xc] sm:$0xf]
          %v1948 = vld [vmem:[#allocation9 + $0x10] sm:$0xf]
          %v1949 = vld [vmem:[#allocation9 + $0x14] sm:$0xf]
          %v1950 = vld [vmem:[#allocation9 + $0x18] sm:$0xf]
          %v1951 = vld [vmem:[#allocation9 + $0x1c] sm:$0xf]
          %v1952 = vld [vmem:[#allocation9 + $0x20] sm:$0xf]
          %v1953 = vld [vmem:[#allocation9 + $0x24] sm:$0xf]
          %v1954 = vld [vmem:[#allocation9 + $0x28] sm:$0xf]
          %v1955 = vld [vmem:[#allocation9 + $0x2c] sm:$0xf]
          %v1956 = vld [vmem:[#allocation9 + $0x30] sm:$0xf]
          %v1957 = vld [vmem:[#allocation9 + $0x34] sm:$0xf]
          %v1958 = vld [vmem:[#allocation9 + $0x38] sm:$0xf]
          %v1959 = vld [vmem:[#allocation9 + $0x3c] sm:$0xf]
          %v1960 = vld [vmem:[%s6] sm:$0x1]
          %v1962 = vlaneseq
          %v1963 = vshrl.u32 %v1962, 7
          %v1964 = vsub.s32 0, %v1963
          %v1965 = vrot.slane %v1960, %v1964
          %v1983 = vunpack.c.l.b16 %v1944
          %v1984 = vunpack.c.l.b16 %v1945
          %v1985 = vunpack.c.l.b16 %v1946
          %v1986 = vunpack.c.l.b16 %v1947
          %v1987 = vunpack.c.l.b16 %v1948
          %v1988 = vunpack.c.l.b16 %v1949
          %v1989 = vunpack.c.l.b16 %v1950
          %v1990 = vunpack.c.l.b16 %v1951
          %v1991 = vunpack.c.l.b16 %v1952
          %v1992 = vunpack.c.l.b16 %v1953
          %v1993 = vunpack.c.l.b16 %v1954
          %v1994 = vunpack.c.l.b16 %v1955
          %v1995 = vunpack.c.l.b16 %v1956
          %v1996 = vunpack.c.l.b16 %v1957
          %v1997 = vunpack.c.l.b16 %v1958
          %v1998 = vunpack.c.l.b16 %v1959
          %v1999 = vpack.c.b16 %v1984, %v1983
          %v2000 = vpack.c.b16 %v1986, %v1985
          %v2001 = vpack.c.b16 %v1988, %v1987
          %v2002 = vpack.c.b16 %v1990, %v1989
          %v2003 = vpack.c.b16 %v1992, %v1991
          %v2004 = vpack.c.b16 %v1994, %v1993
          %v2005 = vpack.c.b16 %v1996, %v1995
          %v2006 = vpack.c.b16 %v1998, %v1997
          %2015 = vmatprep.subr.bf16.mxu0 0
          %2016 = vmatpush1.bf16.msra.mxu0 %v1999
          %2017 = vmatprep.subr.bf16.mxu0 0
          %2018 = vmatpush1.bf16.msra.mxu0 %v2000
          %2019 = vmatprep.subr.bf16.mxu0 0
          %2020 = vmatpush1.bf16.msra.mxu0 %v2001
          %2021 = vmatprep.subr.bf16.mxu0 0
          %2022 = vmatpush1.bf16.msra.mxu0 %v2002
          %2023 = vmatprep.subr.bf16.mxu0 0
          %2024 = vmatpush1.bf16.msra.mxu0 %v2003
          %2025 = vmatprep.subr.bf16.mxu0 0
          %2026 = vmatpush1.bf16.msra.mxu0 %v2004
          %2027 = vmatprep.subr.bf16.mxu0 0
          %2028 = vmatpush1.bf16.msra.mxu0 %v2005
          %2029 = vmatprep.subr.bf16.mxu0 0
          %2030 = vmatpush1.bf16.msra.mxu0 %v2006
          %2031 = vmatprep.subr.bf16.mxu0 0
          %2032 = vmatpush1.bf16.msra.mxu0 0
          %2033 = vmatprep.subr.bf16.mxu0 0
          %2034 = vmatpush1.bf16.msra.mxu0 0
          %2035 = vmatprep.subr.bf16.mxu0 0
          %2036 = vmatpush1.bf16.msra.mxu0 0
          %2037 = vmatprep.subr.bf16.mxu0 0
          %2038 = vmatpush1.bf16.msra.mxu0 0
          %2039 = vmatprep.subr.bf16.mxu0 0
          %2040 = vmatpush1.bf16.msra.mxu0 0
          %2041 = vmatprep.subr.bf16.mxu0 0
          %2042 = vmatpush1.bf16.msra.mxu0 0
          %2043 = vmatprep.subr.bf16.mxu0 0
          %2044 = vmatpush1.bf16.msra.mxu0 0
          %2045 = vmatprep.subr.bf16.mxu0 0
          %2046 = vmatpush1.bf16.msra.mxu0 0
          %2047 = vmatprep.mubr.bf16.mxu0 0
          %2048 = vmatmul.mubr.bf16.gmra.mrb[0].mxu0 %v1928
          %v2049 = vpop.f32.mrb[0].mxu0
          %v2050 = vadd.f32 %v1965, %v2049
          %v2051 = vpop.f32.mrb[0].mxu0
          %v2052 = vpop.f32.mrb[0].mxu0
          %v2053 = vadd.f32 %v1965, %v2052
          %v2054 = vpop.f32.mrb[0].mxu0
          %2055 = vmatprep.mubr.bf16.mxu0 0
          %2056 = vmatmul.mubr.bf16.gmra.mrb[0].mxu0 %v1929
          %v2057 = vpop.f32.mrb[0].mxu0
          %v2058 = vadd.f32 %v1965, %v2057
          %v2059 = vpop.f32.mrb[0].mxu0
          %v2060 = vpop.f32.mrb[0].mxu0
          %v2061 = vadd.f32 %v1965, %v2060
          %v2062 = vpop.f32.mrb[0].mxu0
          %2063 = vmatprep.mubr.bf16.mxu0 0
          %2064 = vmatmul.mubr.bf16.gmra.mrb[0].mxu0 %v1930
          %v2065 = vpop.f32.mrb[0].mxu0
          %v2066 = vadd.f32 %v1965, %v2065
          %v2067 = vpop.f32.mrb[0].mxu0
          %v2068 = vpop.f32.mrb[0].mxu0
          %v2069 = vadd.f32 %v1965, %v2068
          %v2070 = vpop.f32.mrb[0].mxu0
          %2071 = vmatprep.mubr.bf16.mxu0 0
          %2072 = vmatmul.mubr.bf16.gmra.mrb[0].mxu0 %v1931
          %v2073 = vpop.f32.mrb[0].mxu0
          %v2074 = vadd.f32 %v1965, %v2073
          %v2075 = vpop.f32.mrb[0].mxu0
          %v2076 = vpop.f32.mrb[0].mxu0
          %v2077 = vadd.f32 %v1965, %v2076
          %v2078 = vpop.f32.mrb[0].mxu0
          %2079 = vmatprep.mubr.bf16.mxu0 0
          %2080 = vmatmul.mubr.bf16.gmra.mrb[0].mxu0 %v1932
          %v2081 = vpop.f32.mrb[0].mxu0
          %v2082 = vadd.f32 %v1965, %v2081
          %v2083 = vpop.f32.mrb[0].mxu0
          %v2084 = vpop.f32.mrb[0].mxu0
          %v2085 = vadd.f32 %v1965, %v2084
          %v2086 = vpop.f32.mrb[0].mxu0
          %2087 = vmatprep.mubr.bf16.mxu0 0
          %2088 = vmatmul.mubr.bf16.gmra.mrb[0].mxu0 %v1933
          %v2089 = vpop.f32.mrb[0].mxu0
          %v2090 = vadd.f32 %v1965, %v2089
          %v2091 = vpop.f32.mrb[0].mxu0
          %v2092 = vpop.f32.mrb[0].mxu0
          %v2093 = vadd.f32 %v1965, %v2092
          %v2094 = vpop.f32.mrb[0].mxu0
          %2095 = vmatprep.mubr.bf16.mxu0 0
          %2096 = vmatmul.mubr.bf16.gmra.mrb[0].mxu0 %v1934
          %v2097 = vpop.f32.mrb[0].mxu0
          %v2098 = vadd.f32 %v1965, %v2097
          %v2099 = vpop.f32.mrb[0].mxu0
          %v2100 = vpop.f32.mrb[0].mxu0
          %v2101 = vadd.f32 %v1965, %v2100
          %v2102 = vpop.f32.mrb[0].mxu0
          %2103 = vmatprep.mubr.bf16.mxu0 0
          %2104 = vmatmul.mubr.bf16.gmra.mrb[0].mxu0 %v1935
          %v2105 = vpop.f32.mrb[0].mxu0
          %v2106 = vadd.f32 %v1965, %v2105
          %v2107 = vpop.f32.mrb[0].mxu0
          %v2108 = vpop.f32.mrb[0].mxu0
          %v2109 = vadd.f32 %v1965, %v2108
          %v2110 = vpop.f32.mrb[0].mxu0
          %2111 = vmatprep.mubr.bf16.mxu0 0
          %2112 = vmatmul.mubr.bf16.gmra.mrb[0].mxu0 %v1936
          %v2113 = vpop.f32.mrb[0].mxu0
          %v2114 = vadd.f32 %v1965, %v2113
          %v2115 = vpop.f32.mrb[0].mxu0
          %v2116 = vpop.f32.mrb[0].mxu0
          %v2117 = vadd.f32 %v1965, %v2116
          %v2118 = vpop.f32.mrb[0].mxu0
          %2119 = vmatprep.mubr.bf16.mxu0 0
          %2120 = vmatmul.mubr.bf16.gmra.mrb[0].mxu0 %v1937
          %v2121 = vpop.f32.mrb[0].mxu0
          %v2122 = vadd.f32 %v1965, %v2121
          %v2123 = vpop.f32.mrb[0].mxu0
          %v2124 = vpop.f32.mrb[0].mxu0
          %v2125 = vadd.f32 %v1965, %v2124
          %v2126 = vpop.f32.mrb[0].mxu0
          %2127 = vmatprep.mubr.bf16.mxu0 0
          %2128 = vmatmul.mubr.bf16.gmra.mrb[0].mxu0 %v1938
          %v2129 = vpop.f32.mrb[0].mxu0
          %v2130 = vadd.f32 %v1965, %v2129
          %v2131 = vpop.f32.mrb[0].mxu0
          %v2132 = vpop.f32.mrb[0].mxu0
          %v2133 = vadd.f32 %v1965, %v2132
          %v2134 = vpop.f32.mrb[0].mxu0
          %2135 = vmatprep.mubr.bf16.mxu0 0
          %2136 = vmatmul.mubr.bf16.gmra.mrb[0].mxu0 %v1939
          %v2137 = vpop.f32.mrb[0].mxu0
          %v2138 = vadd.f32 %v1965, %v2137
          %v2139 = vpop.f32.mrb[0].mxu0
          %v2140 = vpop.f32.mrb[0].mxu0
          %v2141 = vadd.f32 %v1965, %v2140
          %v2142 = vpop.f32.mrb[0].mxu0
          %2143 = vmatprep.mubr.bf16.mxu0 0
          %2144 = vmatmul.mubr.bf16.gmra.mrb[0].mxu0 %v1940
          %v2145 = vpop.f32.mrb[0].mxu0
          %v2146 = vadd.f32 %v1965, %v2145
          %v2147 = vpop.f32.mrb[0].mxu0
          %v2148 = vpop.f32.mrb[0].mxu0
          %v2149 = vadd.f32 %v1965, %v2148
          %v2150 = vpop.f32.mrb[0].mxu0
          %2151 = vmatprep.mubr.bf16.mxu0 0
          %2152 = vmatmul.mubr.bf16.gmra.mrb[0].mxu0 %v1941
          %v2153 = vpop.f32.mrb[0].mxu0
          %v2154 = vadd.f32 %v1965, %v2153
          %v2155 = vpop.f32.mrb[0].mxu0
          %v2156 = vpop.f32.mrb[0].mxu0
          %v2157 = vadd.f32 %v1965, %v2156
          %v2158 = vpop.f32.mrb[0].mxu0
          %2159 = vmatprep.mubr.bf16.mxu0 0
          %2160 = vmatmul.mubr.bf16.gmra.mrb[0].mxu0 %v1942
          %v2161 = vpop.f32.mrb[0].mxu0
          %v2162 = vadd.f32 %v1965, %v2161
          %v2163 = vpop.f32.mrb[0].mxu0
          %v2164 = vpop.f32.mrb[0].mxu0
          %v2165 = vadd.f32 %v1965, %v2164
          %v2166 = vpop.f32.mrb[0].mxu0
          %2167 = vmatprep.mubr.bf16.mxu0 0
          %2168 = vmatmul.mubr.bf16.gmra.mrb[0].mxu0 %v1943
          %v2169 = vpop.f32.mrb[0].mxu0
          %v2170 = vadd.f32 %v1965, %v2169
          %v2171 = vpop.f32.mrb[0].mxu0
          %v2172 = vpop.f32.mrb[0].mxu0
          %v2173 = vadd.f32 %v1965, %v2172
          %v2174 = vpop.f32.mrb[0].mxu0
          %2175 = vdwg.mxu0
          %2176 = vst [vmem:[%s399] sm:$0xff] %v2050
          %2177 = vst [vmem:[%s399 + $0x8] sm:$0xff] %v2053
          %2178 = vst [vmem:[%s399 + $0x10] sm:$0xff] %v2058
          %2179 = vst [vmem:[%s399 + $0x18] sm:$0xff] %v2061
          %2180 = vst [vmem:[%s399 + $0x20] sm:$0xff] %v2066
          %2181 = vst [vmem:[%s399 + $0x28] sm:$0xff] %v2069
          %2182 = vst [vmem:[%s399 + $0x30] sm:$0xff] %v2074
          %2183 = vst [vmem:[%s399 + $0x38] sm:$0xff] %v2077
          %2184 = vst [vmem:[%s399 + $0x40] sm:$0xff] %v2082
          %2185 = vst [vmem:[%s399 + $0x48] sm:$0xff] %v2085
          %2186 = vst [vmem:[%s399 + $0x50] sm:$0xff] %v2090
          %2187 = vst [vmem:[%s399 + $0x58] sm:$0xff] %v2093
          %2188 = vst [vmem:[%s399 + $0x60] sm:$0xff] %v2098
          %2189 = vst [vmem:[%s399 + $0x68] sm:$0xff] %v2101
          %2190 = vst [vmem:[%s399 + $0x70] sm:$0xff] %v2106
          %2191 = vst [vmem:[%s399 + $0x78] sm:$0xff] %v2109
          %2192 = vst [vmem:[%s399 + $0x80] sm:$0xff] %v2114
          %2193 = vst [vmem:[%s399 + $0x88] sm:$0xff] %v2117
          %2194 = vst [vmem:[%s399 + $0x90] sm:$0xff] %v2122
          %2195 = vst [vmem:[%s399 + $0x98] sm:$0xff] %v2125
          %2196 = vst [vmem:[%s399 + $0xa0] sm:$0xff] %v2130
          %2197 = vst [vmem:[%s399 + $0xa8] sm:$0xff] %v2133
          %2198 = vst [vmem:[%s399 + $0xb0] sm:$0xff] %v2138
          %2199 = vst [vmem:[%s399 + $0xb8] sm:$0xff] %v2141
          %2200 = vst [vmem:[%s399 + $0xc0] sm:$0xff] %v2146
          %2201 = vst [vmem:[%s399 + $0xc8] sm:$0xff] %v2149
          %2202 = vst [vmem:[%s399 + $0xd0] sm:$0xff] %v2154
          %2203 = vst [vmem:[%s399 + $0xd8] sm:$0xff] %v2157
          %2204 = vst [vmem:[%s399 + $0xe0] sm:$0xff] %v2162
          %2205 = vst [vmem:[%s399 + $0xe8] sm:$0xff] %v2165
          %2206 = vst [vmem:[%s399 + $0xf0] sm:$0xff] %v2170
          %2207 = vst [vmem:[%s399 + $0xf8] sm:$0xff] %v2173
        $region76: #{linkx_forward_padded.1} parent=47 // pred_fallthru
          _
        %s2208 = smul.u32 32, %s27
        %p2209 = scmp.lt.s32.totalorder %s2208, 63
        %s2210 = scalar_select %p2209, %s2208, 63
        %s2211 = smul.addr %s2210, 8
        %s2212 = scalar_lea.vmem %s7, %s2211
        // Predicated region
        $region77: #{linkx_forward_padded.1} parent=47 // pred_check
          %p2213 = pneg %p212
        $region78: #{linkx_forward_padded.1} parent=47 // pred_check_branch
          %2215 = sbr.rel (%p2213) target = $region80
        $region79: #{linkx_forward_padded.1} parent=47 // pred_region
          %s2216 = smul.u32 32, %s27
        $region80: #{linkx_forward_padded.1} parent=47 // pred_fallthru
          _
      $region48: #{linkx_forward_padded.1} parent=5 // pred_fallthru
        _
      %p2217 = scmp.le.s32.totalorder 2, %s18
      // Predicated region
      $region81: #{linkx_forward_padded.1} parent=5 // pred_check
        %p2218 = pneg %p2217
      $region82: #{linkx_forward_padded.1} parent=5 // pred_check_branch
        %2220 = sbr.rel (%p2218) target = $region84
      $region83: #{linkx_forward_padded.1} parent=5 // pred_region
        %s2221 = ssub.s32 %s18, 2
        // Predicated region
        $region85: #{linkx_forward_padded.1} parent=83 // pred_check
          %p2222 = pneg %p218
        $region86: #{linkx_forward_padded.1} parent=83 // pred_check_branch
          %2224 = sbr.rel (%p2222) target = $region88
        $region87: #{linkx_forward_padded.1} parent=83 // pred_region
          %s2225 = smul.u32 32, %s29
          %p2226 = scmp.lt.s32.totalorder %s2225, 63
          %s2227 = scalar_select %p2226, %s2225, 63
          %s2228 = smul.addr %s2227, 8
          %s2229 = scalar_lea.vmem %s7, %s2228
        $region88: #{linkx_forward_padded.1} parent=83 // pred_fallthru
          _
      $region84: #{linkx_forward_padded.1} parent=5 // pred_fallthru
        _
    $region6: #{linkx_forward_padded.1} parent=1 // loop_footer
      %s22 = sadd.s32 1, %s18
    $region7: #{linkx_forward_padded.1} parent=1 // loop_footer_branch
      %17 = sbr.rel target = $region3
    $region8: #{linkx_forward_padded.1} parent=1 // loop_exit
      _
    %2230 = vsyncpa [#allocation4], 1
    %s2231 = scalar_lea.sflag [#allocation4], 1
    %2232 = vsyncpa %s2231, 1
    %2233 = vsyncpa [#allocation6], 1
    %2234 = vsyncpa [#allocation10], 1

</llo_original>
